<compile_context>
chip_gen: v7x
topology: tpu7x:2x2x1
jax: 0.10.0
libtpu: 0.0.40
codegen_flags: <defaults>
</compile_context>

<pallas_src>
import functools

import jax
import jax.numpy as jnp
from jax import lax
from jax.experimental import pallas as pl
from jax.experimental.pallas import tpu as pltpu


def _round_up(x, m):
    return (x + m - 1) // m * m


def _pad_cols(a, n):
    if a.shape[-1] == n:
        return a
    pad = [(0, 0)] * (a.ndim - 1) + [(0, n - a.shape[-1])]
    return jnp.pad(a, pad)


def _pad_rows(a, n):
    if a.shape[0] == n:
        return a
    pad = [(0, n - a.shape[0])] + [(0, 0)] * (a.ndim - 1)
    return jnp.pad(a, pad)


# ----------------------------------------------------------------------------
# Kernel 1:  XW_scaled = diag(dinv) @ (X @ W)      (row-parallel, bf16 out)
# ----------------------------------------------------------------------------
def _xw_kernel(x_ref, w_ref, dinv_ref, o_ref):
    xw = jnp.dot(x_ref[...].astype(jnp.bfloat16),
                 w_ref[...].astype(jnp.bfloat16),
                 preferred_element_type=jnp.float32)
    o_ref[...] = (dinv_ref[...] * xw).astype(o_ref.dtype)


def scaled_xw(x, w, dinv_col, *, block_rows=512):
    N, F = x.shape
    Hp = w.shape[1]
    # Full-extent block when N is not a tile multiple (avoids padding copies).
    tm = block_rows if N % block_rows == 0 else N
    return pl.pallas_call(
        _xw_kernel,
        out_shape=jax.ShapeDtypeStruct((N, Hp), jnp.bfloat16),
        grid=(N // tm,),
        in_specs=[
            pl.BlockSpec((tm, F), lambda i: (i, 0)),   # X row panel
            pl.BlockSpec((F, Hp), lambda i: (0, 0)),   # W (resident)
            pl.BlockSpec((tm, 1), lambda i: (i, 0)),   # dinv rows
        ],
        out_specs=pl.BlockSpec((tm, Hp), lambda i: (i, 0)),
        compiler_params=pltpu.CompilerParams(dimension_semantics=("parallel",)),
    )(x, w, dinv_col)


# ----------------------------------------------------------------------------
# Kernel 2:  out = diag(dinv) @ (A_int8 @ XW_scaled) + b   [+ sigmoid(dropout)]
#   grid = (row blocks [parallel], k blocks [arbitrary reduction])
#   f32 VMEM accumulator; A tile cast int8 -> bf16 on the VPU after load.
# ----------------------------------------------------------------------------
def _agg_kernel(a_ref, xw_ref, dinv_ref, b_ref, *rest, apply_act):
    if apply_act:
        mask_ref, o_ref, acc_ref = rest
    else:
        o_ref, acc_ref = rest

    k = pl.program_id(1)

    @pl.when(k == 0)
    def _():
        acc_ref[...] = jnp.zeros_like(acc_ref)

    acc_ref[...] += jnp.dot(a_ref[...].astype(jnp.bfloat16), xw_ref[...],
                            preferred_element_type=jnp.float32)

    @pl.when(k == pl.num_programs(1) - 1)
    def _():
        h = dinv_ref[...] * acc_ref[...] + b_ref[...]
        if apply_act:
            # torch.sigmoid(F.dropout(h, 0.3)) with inverted-dropout mask.
            h = jax.nn.sigmoid(h * mask_ref[...])
        o_ref[...] = h.astype(o_ref.dtype)


def gcn_aggregate(a_int8, xw_scaled, dinv_col, bias, mask=None, *,
                  out_dtype=jnp.float32, block_rows=512, block_k=512):
    N = a_int8.shape[0]
    Hp = xw_scaled.shape[1]
    tm = block_rows if N % block_rows == 0 else N
    tk = block_k if N % block_k == 0 else N
    apply_act = mask is not None

    in_specs = [
        pl.BlockSpec((tm, tk), lambda i, k: (i, k)),   # A tile (int8, raw)
        pl.BlockSpec((tk, Hp), lambda i, k: (k, 0)),   # dinv-scaled X@W panel
        pl.BlockSpec((tm, 1), lambda i, k: (i, 0)),    # dinv rows
        pl.BlockSpec((1, Hp), lambda i, k: (0, 0)),    # bias (resident)
    ]
    inputs = [a_int8, xw_scaled, dinv_col, bias]
    if apply_act:
        in_specs.append(pl.BlockSpec((tm, Hp), lambda i, k: (i, 0)))
        inputs.append(mask)

    return pl.pallas_call(
        functools.partial(_agg_kernel, apply_act=apply_act),
        out_shape=jax.ShapeDtypeStruct((N, Hp), out_dtype),
        grid=(N // tm, N // tk),
        in_specs=in_specs,
        out_specs=pl.BlockSpec((tm, Hp), lambda i, k: (i, 0)),
        scratch_shapes=[pltpu.VMEM((tm, Hp), jnp.float32)],
        compiler_params=pltpu.CompilerParams(
            dimension_semantics=("parallel", "arbitrary")),
    )(*inputs)


# ----------------------------------------------------------------------------
# Kernel 3 (fused tail):
#   score_network(query) = Linear -> BatchNorm1d(batch stats) -> Sigmoid -> Linear
#   score[b, k] = < k_linear[b], names_graph_embedding[cand[b, k]] >
# Vectorized gather: sim = kl @ emb^T, then one-hot select/sum over N.
# ----------------------------------------------------------------------------
def _score_candidates_kernel(q_ref, w1_ref, b1_ref, g_ref, be_ref, w2_ref,
                             b2_ref, emb_ref, idx_ref, o_ref):
    h = jnp.dot(q_ref[...].astype(jnp.bfloat16),
                w1_ref[...].astype(jnp.bfloat16),
                preferred_element_type=jnp.float32) + b1_ref[...]
    # TODO(synk): BatchNorm1d uses per-call batch statistics (train mode);
    # eval-mode running stats are not represented here.
    mean = jnp.mean(h, axis=0, keepdims=True)
    var = jnp.mean((h - mean) ** 2, axis=0, keepdims=True)      # biased var
    hn = (h - mean) * lax.rsqrt(var + 1e-5) * g_ref[...] + be_ref[...]
    s = jax.nn.sigmoid(hn)
    kl = jnp.dot(s.astype(jnp.bfloat16), w2_ref[...].astype(jnp.bfloat16),
                 preferred_element_type=jnp.float32) + b2_ref[...]   # (B, Op)

    emb = emb_ref[...]                                               # (N, Op)
    sim = lax.dot_general(kl, emb, (((1,), (1,)), ((), ())),
                          preferred_element_type=jnp.float32)        # (B, N)
    idx = idx_ref[...]                                               # (B, K)
    B, K = idx.shape
    N = emb.shape[0]
    col = lax.broadcasted_iota(jnp.int32, (B, K, N), 2)
    sel = col == idx[:, :, None]
    o_ref[...] = jnp.sum(jnp.where(sel, sim[:, None, :], 0.0), axis=-1)


def score_candidates(q, w1, b1, gamma, beta, w2, b2, emb, idx):
    vmem = pl.BlockSpec(memory_space=pltpu.MemorySpace.VMEM)
    B = q.shape[0]
    K = idx.shape[1]
    return pl.pallas_call(
        _score_candidates_kernel,
        out_shape=jax.ShapeDtypeStruct((B, K), jnp.float32),
        in_specs=[vmem] * 9,
        out_specs=vmem,
    )(q.astype(jnp.float32), w1.astype(jnp.float32),
      b1.astype(jnp.float32).reshape(1, -1),
      gamma.astype(jnp.float32).reshape(1, -1),
      beta.astype(jnp.float32).reshape(1, -1),
      w2.astype(jnp.float32), b2.astype(jnp.float32).reshape(1, -1),
      emb.astype(jnp.float32), idx.astype(jnp.int32))


# ----------------------------------------------------------------------------
# Glue: dense adjacency as int8 edge counts (+ remaining self loops) and the
# D^{-1/2} vector.  Scatter-add build stays in plain JAX (no clean TPU Pallas
# scatter).
# ----------------------------------------------------------------------------
def build_adjacency(edge_index, num_nodes):
    src, dst = edge_index[0], edge_index[1]
    a = jnp.zeros((num_nodes, num_nodes), jnp.int32).at[dst, src].add(1)
    diag = jnp.diagonal(a)
    a = a + jnp.diag(jnp.where(diag > 0, 0, 1))      # add *remaining* self loops
    deg = jnp.sum(a, axis=1).astype(jnp.float32)     # in-degree incl. self loops
    dinv = jnp.where(deg > 0, lax.rsqrt(deg), 0.0).astype(jnp.float32)[:, None]
    return a.astype(jnp.int8), dinv


# ----------------------------------------------------------------------------
# Full forward pass
# ----------------------------------------------------------------------------
def graphsage_forward(params, query_bert_embedding, query_sparse_embedding,
                      names_embedding, edge_index, candidates_indices,
                      dropout_key, top_k, *, block_rows=512, block_k=512):
    # TODO(synk): self.bert_encoder (pretrained BertModel) is not implemented in
    # Pallas; query_bert_embedding is taken as the precomputed CLS embedding.
    # TODO(synk): self.sparse_encoder.transform (sklearn TF-IDF) has no Pallas
    # equivalent; query_sparse_embedding is taken as a precomputed dense input.
    query_embedding = jnp.concatenate(
        [query_bert_embedding, query_sparse_embedding], axis=1)

    N = names_embedding.shape[0]
    H = params["w_sage1"].shape[1]
    O = params["w_sage2"].shape[1]
    Hp = _round_up(H, 128)       # lane-dense hidden width
    Op = _round_up(O, 128)       # lane-dense output width

    a_int8, dinv = build_adjacency(edge_index, N)

    # Zero-pad the small weights to 128-lane widths; padded columns/rows stay
    # exactly zero through the whole pipeline, so results are unchanged.
    w1 = _pad_cols(params["w_sage1"].astype(jnp.float32), Hp)
    b1 = _pad_cols(params["b_sage1"].astype(jnp.float32).reshape(1, -1), Hp)
    w2 = _pad_cols(_pad_rows(params["w_sage2"].astype(jnp.float32), Hp), Op)
    b2 = _pad_cols(params["b_sage2"].astype(jnp.float32).reshape(1, -1), Op)
    ws2 = _pad_cols(params["w_score2"].astype(jnp.float32), Op)
    bs2 = _pad_cols(params["b_score2"].astype(jnp.float32).reshape(1, -1), Op)

    # F.dropout(x, 0.3) with training=True semantics (inverted dropout).
    # TODO(synk): pltpu.prng_* has no CPU/interpret lowering, so the mask is
    # generated host-side with jax.random and streamed into the epilogue.
    keep = 0.7
    mask = (jax.random.bernoulli(dropout_key, keep, (N, Hp)).astype(jnp.float32)
            / keep)

    # sage1: sigmoid(dropout(A_hat @ (X @ W1) + b1)), bf16 intermediate
    xw1 = scaled_xw(names_embedding.astype(jnp.float32), w1, dinv,
                    block_rows=block_rows)
    h1 = gcn_aggregate(a_int8, xw1, dinv, b1, mask,
                       out_dtype=jnp.bfloat16,
                       block_rows=block_rows, block_k=block_k)

    # sage2: A_hat @ (h1 @ W2) + b2
    xw2 = scaled_xw(h1, w2, dinv, block_rows=block_rows)
    names_graph_embedding = gcn_aggregate(a_int8, xw2, dinv, b2,
                                          out_dtype=jnp.float32,
                                          block_rows=block_rows,
                                          block_k=block_k)

    # fused score_network + per-candidate gather/dot  -> (batch, top_k)
    idx = candidates_indices[:, :top_k]
    return score_candidates(query_embedding, params["w_score1"],
                            params["b_score1"], params["bn_gamma"],
                            params["bn_beta"], ws2, bs2,
                            names_graph_embedding, idx)


# ----------------------------------------------------------------------------
if __name__ == "__main__":
    key = jax.random.PRNGKey(0)

    B = 4                 # batch
    bert_hidden = 32
    sparse_dim = 32
    feature_size = bert_hidden + sparse_dim   # 64
    hidden_size = 32
    output_size = 32
    num_nodes = 16
    num_edges = 40
    top_k = 4

    ks = jax.random.split(key, 16)

    params = {
        "w_sage1": 0.1 * jax.random.normal(ks[0], (feature_size, hidden_size), jnp.float32),
        "b_sage1": 0.1 * jax.random.normal(ks[1], (hidden_size,), jnp.float32),
        "w_sage2": 0.1 * jax.random.normal(ks[2], (hidden_size, output_size), jnp.float32),
        "b_sage2": 0.1 * jax.random.normal(ks[3], (output_size,), jnp.float32),
        "w_score1": 0.1 * jax.random.normal(ks[4], (feature_size, 256), jnp.float32),
        "b_score1": 0.1 * jax.random.normal(ks[5], (1, 256), jnp.float32),
        "bn_gamma": jnp.ones((1, 256), jnp.float32),
        "bn_beta": jnp.zeros((1, 256), jnp.float32),
        "w_score2": 0.1 * jax.random.normal(ks[6], (256, output_size), jnp.float32),
        "b_score2": 0.1 * jax.random.normal(ks[7], (1, output_size), jnp.float32),
        # self.sparse_weight exists in __init__ but is unused in forward()
        "sparse_weight": jnp.ones((1,), jnp.float32),
    }

    query_bert_embedding = jax.random.normal(ks[8], (B, bert_hidden), jnp.float32)
    query_sparse_embedding = jax.random.uniform(ks[9], (B, sparse_dim), jnp.float32)
    names_embedding = jax.random.normal(ks[10], (num_nodes, feature_size), jnp.float32)
    edge_index = jax.random.randint(ks[11], (2, num_edges), 0, num_nodes, jnp.int32)
    candidates_indices = jax.random.randint(ks[12], (B, top_k), 0, num_nodes, jnp.int32)
    dropout_key = ks[13]

    fwd = jax.jit(functools.partial(graphsage_forward, top_k=top_k))
    score = fwd(params, query_bert_embedding, query_sparse_embedding,
                names_embedding, edge_index, candidates_indices, dropout_key)
    score = jax.block_until_ready(score)
    assert score.shape == (B, top_k), score.shape
    print("KERNEL_OK")
</pallas_src>

<mosaic_0001>
module attributes {stable_mosaic.version = 11 : i64} {
  func.func @_xw_kernel(%arg0: i32, %arg1: memref<16x64xf32, #tpu.memory_space<vmem>>, %arg2: memref<64x128xf32, #tpu.memory_space<vmem>>, %arg3: memref<16x1xf32, #tpu.memory_space<vmem>>, %arg4: memref<16x128xbf16, #tpu.memory_space<vmem>>) attributes {dimension_semantics = [#tpu.dimension_semantics<parallel>], iteration_bounds = array<i64: 1>, scalar_prefetch = 0 : i64, scratch_operands = 0 : i64, tpu.core_type = #tpu.core_type<tc>, window_params = [{transform_indices = @transform_0, window_bounds = array<i64: 16, 64>}, {pipeline_mode = #tpu.pipeline_mode<synchronous>, transform_indices = @transform_1, window_bounds = array<i64: 64, 128>}, {transform_indices = @transform_2, window_bounds = array<i64: 16, 1>}, {transform_indices = @transform_3, window_bounds = array<i64: 16, 128>}]} {
    %c0 = arith.constant 0 : index
    %c0_0 = arith.constant 0 : index
    %0 = vector.load %arg1[%c0, %c0_0] : memref<16x64xf32, #tpu.memory_space<vmem>>, vector<16x64xf32>
    %1 = arith.truncf %0 : vector<16x64xf32> to vector<16x64xbf16>
    %c0_1 = arith.constant 0 : index
    %c0_2 = arith.constant 0 : index
    %2 = vector.load %arg2[%c0_1, %c0_2] : memref<64x128xf32, #tpu.memory_space<vmem>>, vector<64x128xf32>
    %3 = arith.truncf %2 : vector<64x128xf32> to vector<64x128xbf16>
    %cst = arith.constant dense<0.000000e+00> : vector<16x128xf32>
    %4 = tpu.matmul %1, %3, %cst {dimension_numbers = #tpu.dot_dimension_numbers<[1], [0], [0], [1], [0, 0, 1, 1], [], []>} : vector<16x64xbf16>, vector<64x128xbf16>, vector<16x128xf32> -> vector<16x128xf32>
    %c0_3 = arith.constant 0 : index
    %c0_4 = arith.constant 0 : index
    %5 = vector.load %arg3[%c0_3, %c0_4] : memref<16x1xf32, #tpu.memory_space<vmem>>, vector<16x1xf32>
    %6 = vector.broadcast %5 : vector<16x1xf32> to vector<16x128xf32>
    %7 = arith.mulf %6, %4 : vector<16x128xf32>
    %8 = arith.truncf %7 : vector<16x128xf32> to vector<16x128xbf16>
    %c0_5 = arith.constant 0 : index
    %c0_6 = arith.constant 0 : index
    %9 = vector.load %arg4[%c0_5, %c0_6] : memref<16x128xbf16, #tpu.memory_space<vmem>>, vector<16x128xbf16>
    tpu.vector_store %arg4[%c0_5, %c0_6], %8 {strides = array<i32>} : memref<16x128xbf16, #tpu.memory_space<vmem>>, vector<16x128xbf16>,
    return
  }
  func.func @transform_0(%arg0: i32) -> (i32, i32) {
    %c0_i32 = arith.constant 0 : i32
    %c0_i32_0 = arith.constant 0 : i32
    return %arg0, %c0_i32 : i32, i32
  }
  func.func @transform_1(%arg0: i32) -> (i32, i32) {
    %c0_i32 = arith.constant 0 : i32
    %c0_i32_0 = arith.constant 0 : i32
    %c0_i32_1 = arith.constant 0 : i32
    return %c0_i32, %c0_i32_0 : i32, i32
  }
  func.func @transform_2(%arg0: i32) -> (i32, i32) {
    %c0_i32 = arith.constant 0 : i32
    %c0_i32_0 = arith.constant 0 : i32
    return %arg0, %c0_i32 : i32, i32
  }
  func.func @transform_3(%arg0: i32) -> (i32, i32) {
    %c0_i32 = arith.constant 0 : i32
    %c0_i32_0 = arith.constant 0 : i32
    return %arg0, %c0_i32 : i32, i32
  }
}

module attributes {stable_mosaic.version = 11 : i64} {
  func.func @_agg_kernel(%arg0: i32, %arg1: i32, %arg2: memref<16x16xi8, #tpu.memory_space<vmem>>, %arg3: memref<16x128xbf16, #tpu.memory_space<vmem>>, %arg4: memref<16x1xf32, #tpu.memory_space<vmem>>, %arg5: memref<1x128xf32, #tpu.memory_space<vmem>>, %arg6: memref<16x128xf32, #tpu.memory_space<vmem>>, %arg7: memref<16x128xbf16, #tpu.memory_space<vmem>>, %arg8: memref<16x128xf32, #tpu.memory_space<vmem>>) attributes {dimension_semantics = [#tpu.dimension_semantics<parallel>, #tpu.dimension_semantics<arbitrary>], iteration_bounds = array<i64: 1, 1>, scalar_prefetch = 0 : i64, scratch_operands = 1 : i64, tpu.core_type = #tpu.core_type<tc>, window_params = [{transform_indices = @transform_0, window_bounds = array<i64: 16, 16>}, {transform_indices = @transform_1, window_bounds = array<i64: 16, 128>}, {transform_indices = @transform_2, window_bounds = array<i64: 16, 1>}, {pipeline_mode = #tpu.pipeline_mode<synchronous>, transform_indices = @transform_3, window_bounds = array<i64: 1, 128>}, {transform_indices = @transform_4, window_bounds = array<i64: 16, 128>}, {transform_indices = @transform_5, window_bounds = array<i64: 16, 128>}]} {
    %c0_i32 = arith.constant 0 : i32
    %0 = arith.cmpi eq, %arg1, %c0_i32 : i32
    %1 = arith.extui %0 : i1 to i32
    %c0_i32_0 = arith.constant 0 : i32
    %2 = arith.cmpi ne, %1, %c0_i32_0 : i32
    scf.if %2 {
      %cst_10 = arith.constant 0.000000e+00 : f32
      %13 = vector.broadcast %cst_10 : f32 to vector<16x128xf32>
      %c0_11 = arith.constant 0 : index
      %c0_12 = arith.constant 0 : index
      %14 = vector.load %arg8[%c0_11, %c0_12] : memref<16x128xf32, #tpu.memory_space<vmem>>, vector<16x128xf32>
      tpu.vector_store %arg8[%c0_11, %c0_12], %13 {strides = array<i32>} : memref<16x128xf32, #tpu.memory_space<vmem>>, vector<16x128xf32>,
    } else {
    }
    %c0 = arith.constant 0 : index
    %c0_1 = arith.constant 0 : index
    %3 = vector.load %arg8[%c0, %c0_1] : memref<16x128xf32, #tpu.memory_space<vmem>>, vector<16x128xf32>
    %c0_2 = arith.constant 0 : index
    %c0_3 = arith.constant 0 : index
    %4 = vector.load %arg2[%c0_2, %c0_3] : memref<16x16xi8, #tpu.memory_space<vmem>>, vector<16x16xi8>
    %5 = arith.sitofp %4 : vector<16x16xi8> to vector<16x16xbf16>
    %c0_4 = arith.constant 0 : index
    %c0_5 = arith.constant 0 : index
    %6 = vector.load %arg3[%c0_4, %c0_5] : memref<16x128xbf16, #tpu.memory_space<vmem>>, vector<16x128xbf16>
    %cst = arith.constant dense<0.000000e+00> : vector<16x128xf32>
    %7 = tpu.matmul %5, %6, %cst {dimension_numbers = #tpu.dot_dimension_numbers<[1], [0], [0], [1], [0, 0, 1, 1], [], []>} : vector<16x16xbf16>, vector<16x128xbf16>, vector<16x128xf32> -> vector<16x128xf32>
    %8 = arith.addf %3, %7 : vector<16x128xf32>
    %c0_6 = arith.constant 0 : index
    %c0_7 = arith.constant 0 : index
    %9 = vector.load %arg8[%c0_6, %c0_7] : memref<16x128xf32, #tpu.memory_space<vmem>>, vector<16x128xf32>
    tpu.vector_store %arg8[%c0_6, %c0_7], %8 {strides = array<i32>} : memref<16x128xf32, #tpu.memory_space<vmem>>, vector<16x128xf32>,
    %c0_i32_8 = arith.constant 0 : i32
    %10 = arith.cmpi eq, %arg1, %c0_i32_8 : i32
    %11 = arith.extui %10 : i1 to i32
    %c0_i32_9 = arith.constant 0 : i32
    %12 = arith.cmpi ne, %11, %c0_i32_9 : i32
    scf.if %12 {
      %c0_10 = arith.constant 0 : index
      %c0_11 = arith.constant 0 : index
      %13 = vector.load %arg4[%c0_10, %c0_11] : memref<16x1xf32, #tpu.memory_space<vmem>>, vector<16x1xf32>
      %c0_12 = arith.constant 0 : index
      %c0_13 = arith.constant 0 : index
      %14 = vector.load %arg8[%c0_12, %c0_13] : memref<16x128xf32, #tpu.memory_space<vmem>>, vector<16x128xf32>
      %15 = vector.broadcast %13 : vector<16x1xf32> to vector<16x128xf32>
      %16 = arith.mulf %15, %14 : vector<16x128xf32>
      %c0_14 = arith.constant 0 : index
      %c0_15 = arith.constant 0 : index
      %17 = vector.load %arg5[%c0_14, %c0_15] : memref<1x128xf32, #tpu.memory_space<vmem>>, vector<1x128xf32>
      %18 = vector.broadcast %17 : vector<1x128xf32> to vector<16x128xf32>
      %19 = arith.addf %16, %18 : vector<16x128xf32>
      %c0_16 = arith.constant 0 : index
      %c0_17 = arith.constant 0 : index
      %20 = vector.load %arg6[%c0_16, %c0_17] : memref<16x128xf32, #tpu.memory_space<vmem>>, vector<16x128xf32>
      %21 = arith.mulf %19, %20 : vector<16x128xf32>
      %22 = arith.negf %21 : vector<16x128xf32>
      %23 = math.exp %22 : vector<16x128xf32>
      %cst_18 = arith.constant 1.000000e+00 : f32
      %24 = vector.broadcast %cst_18 : f32 to vector<16x128xf32>
      %25 = arith.addf %24, %23 : vector<16x128xf32>
      %26 = arith.divf %24, %25 : vector<16x128xf32>
      %27 = arith.truncf %26 : vector<16x128xf32> to vector<16x128xbf16>
      %c0_19 = arith.constant 0 : index
      %c0_20 = arith.constant 0 : index
      %28 = vector.load %arg7[%c0_19, %c0_20] : memref<16x128xbf16, #tpu.memory_space<vmem>>, vector<16x128xbf16>
      tpu.vector_store %arg7[%c0_19, %c0_20], %27 {strides = array<i32>} : memref<16x128xbf16, #tpu.memory_space<vmem>>, vector<16x128xbf16>,
    } else {
    }
    return
  }
  func.func @transform_0(%arg0: i32, %arg1: i32) -> (i32, i32) {
    %c0_i32 = arith.constant 0 : i32
    return %arg0, %arg1 : i32, i32
  }
  func.func @transform_1(%arg0: i32, %arg1: i32) -> (i32, i32) {
    %c0_i32 = arith.constant 0 : i32
    %c0_i32_0 = arith.constant 0 : i32
    return %arg1, %c0_i32 : i32, i32
  }
  func.func @transform_2(%arg0: i32, %arg1: i32) -> (i32, i32) {
    %c0_i32 = arith.constant 0 : i32
    %c0_i32_0 = arith.constant 0 : i32
    return %arg0, %c0_i32 : i32, i32
  }
  func.func @transform_3(%arg0: i32, %arg1: i32) -> (i32, i32) {
    %c0_i32 = arith.constant 0 : i32
    %c0_i32_0 = arith.constant 0 : i32
    %c0_i32_1 = arith.constant 0 : i32
    return %c0_i32, %c0_i32_0 : i32, i32
  }
  func.func @transform_4(%arg0: i32, %arg1: i32) -> (i32, i32) {
    %c0_i32 = arith.constant 0 : i32
    %c0_i32_0 = arith.constant 0 : i32
    return %arg0, %c0_i32 : i32, i32
  }
  func.func @transform_5(%arg0: i32, %arg1: i32) -> (i32, i32) {
    %c0_i32 = arith.constant 0 : i32
    %c0_i32_0 = arith.constant 0 : i32
    return %arg0, %c0_i32 : i32, i32
  }
}

module attributes {stable_mosaic.version = 11 : i64} {
  func.func @_agg_kernel(%arg0: i32, %arg1: i32, %arg2: memref<16x16xi8, #tpu.memory_space<vmem>>, %arg3: memref<16x128xbf16, #tpu.memory_space<vmem>>, %arg4: memref<16x1xf32, #tpu.memory_space<vmem>>, %arg5: memref<1x128xf32, #tpu.memory_space<vmem>>, %arg6: memref<16x128xf32, #tpu.memory_space<vmem>>, %arg7: memref<16x128xf32, #tpu.memory_space<vmem>>) attributes {dimension_semantics = [#tpu.dimension_semantics<parallel>, #tpu.dimension_semantics<arbitrary>], iteration_bounds = array<i64: 1, 1>, scalar_prefetch = 0 : i64, scratch_operands = 1 : i64, tpu.core_type = #tpu.core_type<tc>, window_params = [{transform_indices = @transform_0, window_bounds = array<i64: 16, 16>}, {transform_indices = @transform_1, window_bounds = array<i64: 16, 128>}, {transform_indices = @transform_2, window_bounds = array<i64: 16, 1>}, {pipeline_mode = #tpu.pipeline_mode<synchronous>, transform_indices = @transform_3, window_bounds = array<i64: 1, 128>}, {transform_indices = @transform_4, window_bounds = array<i64: 16, 128>}]} {
    %c0_i32 = arith.constant 0 : i32
    %0 = arith.cmpi eq, %arg1, %c0_i32 : i32
    %1 = arith.extui %0 : i1 to i32
    %c0_i32_0 = arith.constant 0 : i32
    %2 = arith.cmpi ne, %1, %c0_i32_0 : i32
    scf.if %2 {
      %cst_10 = arith.constant 0.000000e+00 : f32
      %13 = vector.broadcast %cst_10 : f32 to vector<16x128xf32>
      %c0_11 = arith.constant 0 : index
      %c0_12 = arith.constant 0 : index
      %14 = vector.load %arg7[%c0_11, %c0_12] : memref<16x128xf32, #tpu.memory_space<vmem>>, vector<16x128xf32>
      tpu.vector_store %arg7[%c0_11, %c0_12], %13 {strides = array<i32>} : memref<16x128xf32, #tpu.memory_space<vmem>>, vector<16x128xf32>,
    } else {
    }
    %c0 = arith.constant 0 : index
    %c0_1 = arith.constant 0 : index
    %3 = vector.load %arg7[%c0, %c0_1] : memref<16x128xf32, #tpu.memory_space<vmem>>, vector<16x128xf32>
    %c0_2 = arith.constant 0 : index
    %c0_3 = arith.constant 0 : index
    %4 = vector.load %arg2[%c0_2, %c0_3] : memref<16x16xi8, #tpu.memory_space<vmem>>, vector<16x16xi8>
    %5 = arith.sitofp %4 : vector<16x16xi8> to vector<16x16xbf16>
    %c0_4 = arith.constant 0 : index
    %c0_5 = arith.constant 0 : index
    %6 = vector.load %arg3[%c0_4, %c0_5] : memref<16x128xbf16, #tpu.memory_space<vmem>>, vector<16x128xbf16>
    %cst = arith.constant dense<0.000000e+00> : vector<16x128xf32>
    %7 = tpu.matmul %5, %6, %cst {dimension_numbers = #tpu.dot_dimension_numbers<[1], [0], [0], [1], [0, 0, 1, 1], [], []>} : vector<16x16xbf16>, vector<16x128xbf16>, vector<16x128xf32> -> vector<16x128xf32>
    %8 = arith.addf %3, %7 : vector<16x128xf32>
    %c0_6 = arith.constant 0 : index
    %c0_7 = arith.constant 0 : index
    %9 = vector.load %arg7[%c0_6, %c0_7] : memref<16x128xf32, #tpu.memory_space<vmem>>, vector<16x128xf32>
    tpu.vector_store %arg7[%c0_6, %c0_7], %8 {strides = array<i32>} : memref<16x128xf32, #tpu.memory_space<vmem>>, vector<16x128xf32>,
    %c0_i32_8 = arith.constant 0 : i32
    %10 = arith.cmpi eq, %arg1, %c0_i32_8 : i32
    %11 = arith.extui %10 : i1 to i32
    %c0_i32_9 = arith.constant 0 : i32
    %12 = arith.cmpi ne, %11, %c0_i32_9 : i32
    scf.if %12 {
      %c0_10 = arith.constant 0 : index
      %c0_11 = arith.constant 0 : index
      %13 = vector.load %arg4[%c0_10, %c0_11] : memref<16x1xf32, #tpu.memory_space<vmem>>, vector<16x1xf32>
      %c0_12 = arith.constant 0 : index
      %c0_13 = arith.constant 0 : index
      %14 = vector.load %arg7[%c0_12, %c0_13] : memref<16x128xf32, #tpu.memory_space<vmem>>, vector<16x128xf32>
      %15 = vector.broadcast %13 : vector<16x1xf32> to vector<16x128xf32>
      %16 = arith.mulf %15, %14 : vector<16x128xf32>
      %c0_14 = arith.constant 0 : index
      %c0_15 = arith.constant 0 : index
      %17 = vector.load %arg5[%c0_14, %c0_15] : memref<1x128xf32, #tpu.memory_space<vmem>>, vector<1x128xf32>
      %18 = vector.broadcast %17 : vector<1x128xf32> to vector<16x128xf32>
      %19 = arith.addf %16, %18 : vector<16x128xf32>
      %c0_16 = arith.constant 0 : index
      %c0_17 = arith.constant 0 : index
      %20 = vector.load %arg6[%c0_16, %c0_17] : memref<16x128xf32, #tpu.memory_space<vmem>>, vector<16x128xf32>
      tpu.vector_store %arg6[%c0_16, %c0_17], %19 {strides = array<i32>} : memref<16x128xf32, #tpu.memory_space<vmem>>, vector<16x128xf32>,
    } else {
    }
    return
  }
  func.func @transform_0(%arg0: i32, %arg1: i32) -> (i32, i32) {
    %c0_i32 = arith.constant 0 : i32
    return %arg0, %arg1 : i32, i32
  }
  func.func @transform_1(%arg0: i32, %arg1: i32) -> (i32, i32) {
    %c0_i32 = arith.constant 0 : i32
    %c0_i32_0 = arith.constant 0 : i32
    return %arg1, %c0_i32 : i32, i32
  }
  func.func @transform_2(%arg0: i32, %arg1: i32) -> (i32, i32) {
    %c0_i32 = arith.constant 0 : i32
    %c0_i32_0 = arith.constant 0 : i32
    return %arg0, %c0_i32 : i32, i32
  }
  func.func @transform_3(%arg0: i32, %arg1: i32) -> (i32, i32) {
    %c0_i32 = arith.constant 0 : i32
    %c0_i32_0 = arith.constant 0 : i32
    %c0_i32_1 = arith.constant 0 : i32
    return %c0_i32, %c0_i32_0 : i32, i32
  }
  func.func @transform_4(%arg0: i32, %arg1: i32) -> (i32, i32) {
    %c0_i32 = arith.constant 0 : i32
    %c0_i32_0 = arith.constant 0 : i32
    return %arg0, %c0_i32 : i32, i32
  }
}

module attributes {stable_mosaic.version = 11 : i64} {
  func.func @_xw_kernel(%arg0: i32, %arg1: memref<16x128xbf16, #tpu.memory_space<vmem>>, %arg2: memref<128x128xf32, #tpu.memory_space<vmem>>, %arg3: memref<16x1xf32, #tpu.memory_space<vmem>>, %arg4: memref<16x128xbf16, #tpu.memory_space<vmem>>) attributes {dimension_semantics = [#tpu.dimension_semantics<parallel>], iteration_bounds = array<i64: 1>, scalar_prefetch = 0 : i64, scratch_operands = 0 : i64, tpu.core_type = #tpu.core_type<tc>, window_params = [{transform_indices = @transform_0, window_bounds = array<i64: 16, 128>}, {pipeline_mode = #tpu.pipeline_mode<synchronous>, transform_indices = @transform_1, window_bounds = array<i64: 128, 128>}, {transform_indices = @transform_2, window_bounds = array<i64: 16, 1>}, {transform_indices = @transform_3, window_bounds = array<i64: 16, 128>}]} {
    %c0 = arith.constant 0 : index
    %c0_0 = arith.constant 0 : index
    %0 = vector.load %arg1[%c0, %c0_0] : memref<16x128xbf16, #tpu.memory_space<vmem>>, vector<16x128xbf16>
    %c0_1 = arith.constant 0 : index
    %c0_2 = arith.constant 0 : index
    %1 = vector.load %arg2[%c0_1, %c0_2] : memref<128x128xf32, #tpu.memory_space<vmem>>, vector<128x128xf32>
    %2 = arith.truncf %1 : vector<128x128xf32> to vector<128x128xbf16>
    %cst = arith.constant dense<0.000000e+00> : vector<16x128xf32>
    %3 = tpu.matmul %0, %2, %cst {dimension_numbers = #tpu.dot_dimension_numbers<[1], [0], [0], [1], [0, 0, 1, 1], [], []>} : vector<16x128xbf16>, vector<128x128xbf16>, vector<16x128xf32> -> vector<16x128xf32>
    %c0_3 = arith.constant 0 : index
    %c0_4 = arith.constant 0 : index
    %4 = vector.load %arg3[%c0_3, %c0_4] : memref<16x1xf32, #tpu.memory_space<vmem>>, vector<16x1xf32>
    %5 = vector.broadcast %4 : vector<16x1xf32> to vector<16x128xf32>
    %6 = arith.mulf %5, %3 : vector<16x128xf32>
    %7 = arith.truncf %6 : vector<16x128xf32> to vector<16x128xbf16>
    %c0_5 = arith.constant 0 : index
    %c0_6 = arith.constant 0 : index
    %8 = vector.load %arg4[%c0_5, %c0_6] : memref<16x128xbf16, #tpu.memory_space<vmem>>, vector<16x128xbf16>
    tpu.vector_store %arg4[%c0_5, %c0_6], %7 {strides = array<i32>} : memref<16x128xbf16, #tpu.memory_space<vmem>>, vector<16x128xbf16>,
    return
  }
  func.func @transform_0(%arg0: i32) -> (i32, i32) {
    %c0_i32 = arith.constant 0 : i32
    %c0_i32_0 = arith.constant 0 : i32
    return %arg0, %c0_i32 : i32, i32
  }
  func.func @transform_1(%arg0: i32) -> (i32, i32) {
    %c0_i32 = arith.constant 0 : i32
    %c0_i32_0 = arith.constant 0 : i32
    %c0_i32_1 = arith.constant 0 : i32
    return %c0_i32, %c0_i32_0 : i32, i32
  }
  func.func @transform_2(%arg0: i32) -> (i32, i32) {
    %c0_i32 = arith.constant 0 : i32
    %c0_i32_0 = arith.constant 0 : i32
    return %arg0, %c0_i32 : i32, i32
  }
  func.func @transform_3(%arg0: i32) -> (i32, i32) {
    %c0_i32 = arith.constant 0 : i32
    %c0_i32_0 = arith.constant 0 : i32
    return %arg0, %c0_i32 : i32, i32
  }
}

module attributes {stable_mosaic.version = 11 : i64} {
  func.func @_score_candidates_kernel(%arg0: memref<4x64xf32, #tpu.memory_space<vmem>>, %arg1: memref<64x256xf32, #tpu.memory_space<vmem>>, %arg2: memref<1x256xf32, #tpu.memory_space<vmem>>, %arg3: memref<1x256xf32, #tpu.memory_space<vmem>>, %arg4: memref<1x256xf32, #tpu.memory_space<vmem>>, %arg5: memref<256x128xf32, #tpu.memory_space<vmem>>, %arg6: memref<1x128xf32, #tpu.memory_space<vmem>>, %arg7: memref<16x128xf32, #tpu.memory_space<vmem>>, %arg8: memref<4x4xi32, #tpu.memory_space<vmem>>, %arg9: memref<4x4xf32, #tpu.memory_space<vmem>>) attributes {dimension_semantics = [], scalar_prefetch = 0 : i64, scratch_operands = 0 : i64, tpu.core_type = #tpu.core_type<tc>} {
    %c0 = arith.constant 0 : index
    %c0_0 = arith.constant 0 : index
    %0 = vector.load %arg0[%c0, %c0_0] : memref<4x64xf32, #tpu.memory_space<vmem>>, vector<4x64xf32>
    %1 = arith.truncf %0 : vector<4x64xf32> to vector<4x64xbf16>
    %c0_1 = arith.constant 0 : index
    %c0_2 = arith.constant 0 : index
    %2 = vector.load %arg1[%c0_1, %c0_2] : memref<64x256xf32, #tpu.memory_space<vmem>>, vector<64x256xf32>
    %3 = arith.truncf %2 : vector<64x256xf32> to vector<64x256xbf16>
    %cst = arith.constant dense<0.000000e+00> : vector<4x256xf32>
    %4 = tpu.matmul %1, %3, %cst {dimension_numbers = #tpu.dot_dimension_numbers<[1], [0], [0], [1], [0, 0, 1, 1], [], []>} : vector<4x64xbf16>, vector<64x256xbf16>, vector<4x256xf32> -> vector<4x256xf32>
    %c0_3 = arith.constant 0 : index
    %c0_4 = arith.constant 0 : index
    %5 = vector.load %arg2[%c0_3, %c0_4] : memref<1x256xf32, #tpu.memory_space<vmem>>, vector<1x256xf32>
    %6 = vector.broadcast %5 : vector<1x256xf32> to vector<4x256xf32>
    %7 = arith.addf %4, %6 : vector<4x256xf32>
    %cst_5 = arith.constant dense<0.000000e+00> : vector<256xf32>
    %8 = vector.multi_reduction <add>, %7, %cst_5 [0] : vector<4x256xf32> to vector<256xf32>
    %9 = vector.shape_cast %8 : vector<256xf32> to vector<1x256xf32>
    %cst_6 = arith.constant 4.000000e+00 : f32
    %10 = vector.broadcast %cst_6 : f32 to vector<1x256xf32>
    %11 = arith.divf %9, %10 : vector<1x256xf32>
    %12 = vector.broadcast %11 : vector<1x256xf32> to vector<4x256xf32>
    %13 = arith.subf %7, %12 : vector<4x256xf32>
    %14 = arith.mulf %13, %13 : vector<4x256xf32>
    %cst_7 = arith.constant dense<0.000000e+00> : vector<256xf32>
    %15 = vector.multi_reduction <add>, %14, %cst_7 [0] : vector<4x256xf32> to vector<256xf32>
    %16 = vector.shape_cast %15 : vector<256xf32> to vector<1x256xf32>
    %cst_8 = arith.constant 4.000000e+00 : f32
    %17 = vector.broadcast %cst_8 : f32 to vector<1x256xf32>
    %18 = arith.divf %16, %17 : vector<1x256xf32>
    %19 = vector.broadcast %11 : vector<1x256xf32> to vector<4x256xf32>
    %20 = arith.subf %7, %19 : vector<4x256xf32>
    %cst_9 = arith.constant 9.99999974E-6 : f32
    %21 = vector.broadcast %cst_9 : f32 to vector<1x256xf32>
    %22 = arith.addf %18, %21 : vector<1x256xf32>
    %23 = math.rsqrt %22 : vector<1x256xf32>
    %24 = vector.broadcast %23 : vector<1x256xf32> to vector<4x256xf32>
    %25 = arith.mulf %20, %24 : vector<4x256xf32>
    %c0_10 = arith.constant 0 : index
    %c0_11 = arith.constant 0 : index
    %26 = vector.load %arg3[%c0_10, %c0_11] : memref<1x256xf32, #tpu.memory_space<vmem>>, vector<1x256xf32>
    %27 = vector.broadcast %26 : vector<1x256xf32> to vector<4x256xf32>
    %28 = arith.mulf %25, %27 : vector<4x256xf32>
    %c0_12 = arith.constant 0 : index
    %c0_13 = arith.constant 0 : index
    %29 = vector.load %arg4[%c0_12, %c0_13] : memref<1x256xf32, #tpu.memory_space<vmem>>, vector<1x256xf32>
    %30 = vector.broadcast %29 : vector<1x256xf32> to vector<4x256xf32>
    %31 = arith.addf %28, %30 : vector<4x256xf32>
    %32 = arith.negf %31 : vector<4x256xf32>
    %33 = math.exp %32 : vector<4x256xf32>
    %cst_14 = arith.constant 1.000000e+00 : f32
    %34 = vector.broadcast %cst_14 : f32 to vector<4x256xf32>
    %35 = arith.addf %34, %33 : vector<4x256xf32>
    %36 = arith.divf %34, %35 : vector<4x256xf32>
    %37 = arith.truncf %36 : vector<4x256xf32> to vector<4x256xbf16>
    %c0_15 = arith.constant 0 : index
    %c0_16 = arith.constant 0 : index
    %38 = vector.load %arg5[%c0_15, %c0_16] : memref<256x128xf32, #tpu.memory_space<vmem>>, vector<256x128xf32>
    %39 = arith.truncf %38 : vector<256x128xf32> to vector<256x128xbf16>
    %cst_17 = arith.constant dense<0.000000e+00> : vector<4x128xf32>
    %40 = tpu.matmul %37, %39, %cst_17 {dimension_numbers = #tpu.dot_dimension_numbers<[1], [0], [0], [1], [0, 0, 1, 1], [], []>} : vector<4x256xbf16>, vector<256x128xbf16>, vector<4x128xf32> -> vector<4x128xf32>
    %c0_18 = arith.constant 0 : index
    %c0_19 = arith.constant 0 : index
    %41 = vector.load %arg6[%c0_18, %c0_19] : memref<1x128xf32, #tpu.memory_space<vmem>>, vector<1x128xf32>
    %42 = vector.broadcast %41 : vector<1x128xf32> to vector<4x128xf32>
    %43 = arith.addf %40, %42 : vector<4x128xf32>
    %c0_20 = arith.constant 0 : index
    %c0_21 = arith.constant 0 : index
    %44 = vector.load %arg7[%c0_20, %c0_21] : memref<16x128xf32, #tpu.memory_space<vmem>>, vector<16x128xf32>
    %cst_22 = arith.constant dense<0.000000e+00> : vector<4x16xf32>
    %45 = tpu.matmul %43, %44, %cst_22 {dimension_numbers = #tpu.dot_dimension_numbers<[1], [1], [0], [0], [0, 0, 1, 0], [], []>} : vector<4x128xf32>, vector<16x128xf32>, vector<4x16xf32> -> vector<4x16xf32>
    %c0_23 = arith.constant 0 : index
    %c0_24 = arith.constant 0 : index
    %46 = vector.load %arg8[%c0_23, %c0_24] : memref<4x4xi32, #tpu.memory_space<vmem>>, vector<4x4xi32>
    %47 = tpu.iota {dimensions = array<i32: 2>} : vector<4x4x16xi32>
    %48 = vector.shape_cast %46 : vector<4x4xi32> to vector<4x4x1xi32>
    %49 = vector.broadcast %48 : vector<4x4x1xi32> to vector<4x4x16xi32>
    %50 = arith.cmpi eq, %47, %49 : vector<4x4x16xi32>
    %51 = vector.shape_cast %45 : vector<4x16xf32> to vector<4x1x16xf32>
    %cst_25 = arith.constant 0.000000e+00 : f32
    %52 = vector.shape_cast %51 : vector<4x1x16xf32> to vector<4x1x16xf32>
    %53 = vector.broadcast %52 : vector<4x1x16xf32> to vector<4x4x16xf32>
    %54 = vector.broadcast %cst_25 : f32 to vector<4x4x16xf32>
    %55 = arith.select %50, %53, %54 : vector<4x4x16xi1>, vector<4x4x16xf32>
    %cst_26 = arith.constant dense<0.000000e+00> : vector<4x4xf32>
    %56 = vector.multi_reduction <add>, %55, %cst_26 [2] : vector<4x4x16xf32> to vector<4x4xf32>
    %c0_27 = arith.constant 0 : index
    %c0_28 = arith.constant 0 : index
    %57 = vector.load %arg9[%c0_27, %c0_28] : memref<4x4xf32, #tpu.memory_space<vmem>>, vector<4x4xf32>
    tpu.vector_store %arg9[%c0_27, %c0_28], %56 {strides = array<i32>} : memref<4x4xf32, #tpu.memory_space<vmem>>, vector<4x4xf32>,
    return
  }
}

</mosaic_0001>

<llo_original>
// kernel: graphsage_forward.5
$region0: #{graphsage_forward.5}
  #allocation0 [shape = 'u32[]', space=smem, size = 0x4, offset = 0x4, fixed_abs, tag = 'smem constant byte address 0x4 - core index']
  #allocation1 [shape = 'u32[144,128]{1,0:T(1,128)}', space=vmem, size = 0x12000, scoped, tag = 'internal scratch']
  %s0 = inlined_call_operand.vmem [shape: f32[16,64], index: 0, kind: input, shape index: {}]
  %s1 = inlined_call_operand.vmem [shape: f32[64,128], index: 1, kind: input, shape index: {}]
  %s2 = inlined_call_operand.vmem [shape: f32[16,1], index: 2, kind: input, shape index: {}]
  %s3 = inlined_call_operand.vmem [shape: bf16[16,128], index: 3, kind: output, shape index: {}]
  %s4 = sld [smem:[#allocation0]]
  $region22: #{graphsage_forward.5} parent=0
    _
  %s6 = ssub.s32 1, %s4
  %s7 = scalar_select 0, %s6, %s4
  // Predicated region
  $region2: #{graphsage_forward.5} parent=0 // pred_check
    _
  $region3: #{graphsage_forward.5} parent=0 // pred_check_branch
    %9 = sbr.rel (0) target = $region5
  $region4: #{graphsage_forward.5} parent=0 // pred_region
    _
  $region5: #{graphsage_forward.5} parent=0 // pred_fallthru
    _
  // Predicated region
  $region6: #{graphsage_forward.5} parent=0 // pred_check
    _
  $region7: #{graphsage_forward.5} parent=0 // pred_check_branch
    %11 = sbr.rel (0) target = $region9
  $region8: #{graphsage_forward.5} parent=0 // pred_region
    _
  $region9: #{graphsage_forward.5} parent=0 // pred_fallthru
    _
  // Predicated region
  $region10: #{graphsage_forward.5} parent=0 // pred_check
    _
  $region11: #{graphsage_forward.5} parent=0 // pred_check_branch
    %13 = sbr.rel (0) target = $region13
  $region12: #{graphsage_forward.5} parent=0 // pred_region
    _
  $region13: #{graphsage_forward.5} parent=0 // pred_fallthru
    _
  %v15 = vld [vmem:[%s0] sm:$0xff]
  %v16 = vld [vmem:[%s0 + $0x8] sm:$0xff]
  %v17 = vpack.c.bf16 %v16, %v15
  %v18 = vld [vmem:[%s1] sm:$0xff]
  %v19 = vld [vmem:[%s1 + $0x8] sm:$0xff]
  %v20 = vld [vmem:[%s1 + $0x10] sm:$0xff]
  %v21 = vld [vmem:[%s1 + $0x18] sm:$0xff]
  %v22 = vld [vmem:[%s1 + $0x20] sm:$0xff]
  %v23 = vld [vmem:[%s1 + $0x28] sm:$0xff]
  %v24 = vld [vmem:[%s1 + $0x30] sm:$0xff]
  %v25 = vld [vmem:[%s1 + $0x38] sm:$0xff]
  %v26 = vpack.c.bf16 %v19, %v18
  %v27 = vpack.c.bf16 %v21, %v20
  %v28 = vpack.c.bf16 %v23, %v22
  %v29 = vpack.c.bf16 %v25, %v24
  %vm30 = vcmask 523264
  %v32 = vsel %vm30, %v17, 0
  %34 = vmatprep.subr.bf16.mxu0 0
  %35 = vmatpush1.bf16.msra.mxu0 %v26
  %36 = vmatprep.subr.bf16.mxu0 0
  %37 = vmatpush1.bf16.msra.mxu0 %v27
  %38 = vmatprep.subr.bf16.mxu0 0
  %39 = vmatpush1.bf16.msra.mxu0 %v28
  %40 = vmatprep.subr.bf16.mxu0 0
  %41 = vmatpush1.bf16.msra.mxu0 %v29
  %42 = vmatprep.subr.bf16.mxu0 0
  %43 = vmatpush1.bf16.msra.mxu0 0
  %44 = vmatprep.subr.bf16.mxu0 0
  %45 = vmatpush1.bf16.msra.mxu0 0
  %46 = vmatprep.subr.bf16.mxu0 0
  %47 = vmatpush1.bf16.msra.mxu0 0
  %48 = vmatprep.subr.bf16.mxu0 0
  %49 = vmatpush1.bf16.msra.mxu0 0
  %50 = vmatprep.subr.bf16.mxu0 0
  %51 = vmatpush1.bf16.msra.mxu0 0
  %52 = vmatprep.subr.bf16.mxu0 0
  %53 = vmatpush1.bf16.msra.mxu0 0
  %54 = vmatprep.subr.bf16.mxu0 0
  %55 = vmatpush1.bf16.msra.mxu0 0
  %56 = vmatprep.subr.bf16.mxu0 0
  %57 = vmatpush1.bf16.msra.mxu0 0
  %58 = vmatprep.subr.bf16.mxu0 0
  %59 = vmatpush1.bf16.msra.mxu0 0
  %60 = vmatprep.subr.bf16.mxu0 0
  %61 = vmatpush1.bf16.msra.mxu0 0
  %62 = vmatprep.subr.bf16.mxu0 0
  %63 = vmatpush1.bf16.msra.mxu0 0
  %64 = vmatprep.subr.bf16.mxu0 0
  %65 = vmatpush1.bf16.msra.mxu0 0
  %66 = vmatprep.mubr.bf16.mxu0 0
  %67 = vmatmul.mubr.bf16.gmra.mrb[0].mxu0 %v32
  %v68 = vpop.f32.mrb[0].mxu0
  %v69 = vadd.f32 0.0, %v68
  %v70 = vpop.f32.mrb[0].mxu0
  %v71 = vpop.f32.mrb[0].mxu0
  %v72 = vadd.f32 0.0, %v71
  %v73 = vpop.f32.mrb[0].mxu0
  %74 = vdwg.mxu0
  %v75 = vld [vmem:[%s2] sm:$0xff]
  %v76 = vld [vmem:[%s2 + $0x8] sm:$0xff]
  %78 = vset.pattern.permute.xlu0 0
  %79 = vperm.xlu0 %78, %v75
  %v80 = vpop.permute.xlu0 %79
  %83 = vset.pattern.permute.xlu0 0
  %84 = vperm.xlu0 %83, %v76
  %v85 = vpop.permute.xlu0 %84
  %v87 = vmul.f32 %v80, %v69
  %v88 = vmul.f32 %v85, %v72
  %v89 = vpack.c.bf16 %v88, %v87
  %v91 = vunpack.c.l.b16 %v89
  %v92 = vunpack.c.h.b16 %v89
  %v93 = vpack.c.b16 %v91, %v91
  %v94 = vpack.c.b16 %v92, %v92
  %97 = vst [vmem:[%s3] sm:$0xf] %v93
  %98 = vst [vmem:[%s3 + $0x4] sm:$0xf] %v94
  // Predicated region
  $region14: #{graphsage_forward.5} parent=0 // pred_check
    _
  $region15: #{graphsage_forward.5} parent=0 // pred_check_branch
    %100 = sbr.rel (0) target = $region17
  $region16: #{graphsage_forward.5} parent=0 // pred_region
    _
  $region17: #{graphsage_forward.5} parent=0 // pred_fallthru
    _
  // Predicated region
  $region18: #{graphsage_forward.5} parent=0 // pred_check
    _
  $region19: #{graphsage_forward.5} parent=0 // pred_check_branch
    %102 = sbr.rel (0) target = $region21
  $region20: #{graphsage_forward.5} parent=0 // pred_region
    _
  $region21: #{graphsage_forward.5} parent=0 // pred_fallthru
    _

// kernel: graphsage_forward.6
$region0: #{graphsage_forward.6}
  #allocation0 [shape = 'u32[]', space=smem, size = 0x4, offset = 0x4, fixed_abs, tag = 'smem constant byte address 0x4 - core index']
  #allocation1 [shape = 'u32[144,128]{1,0:T(1,128)}', space=vmem, size = 0x12000, scoped, tag = 'internal scratch']
  #allocation2 [shape = 'f32[16,128]{1,0:T(8,128)}', space=vmem, size = 0x2000, scoped, tag = 'scratch operand']
  %s0 = inlined_call_operand.vmem [shape: s8[16,16], index: 0, kind: input, shape index: {}]
  %s1 = inlined_call_operand.vmem [shape: bf16[16,128], index: 1, kind: input, shape index: {}]
  %s2 = inlined_call_operand.vmem [shape: f32[16,1], index: 2, kind: input, shape index: {}]
  %s3 = inlined_call_operand.vmem [shape: f32[1,128], index: 3, kind: input, shape index: {}]
  %s4 = inlined_call_operand.vmem [shape: f32[16,128], index: 4, kind: input, shape index: {}]
  %s5 = inlined_call_operand.vmem [shape: bf16[16,128], index: 5, kind: output, shape index: {}]
  %s6 = sld [smem:[#allocation0]]
  $region38: #{graphsage_forward.6} parent=0
    _
  %s8 = ssub.s32 1, %s6
  %s9 = scalar_select 0, %s8, %s6
  // Predicated region
  $region2: #{graphsage_forward.6} parent=0 // pred_check
    _
  $region3: #{graphsage_forward.6} parent=0 // pred_check_branch
    %11 = sbr.rel (0) target = $region5
  $region4: #{graphsage_forward.6} parent=0 // pred_region
    _
  $region5: #{graphsage_forward.6} parent=0 // pred_fallthru
    _
  // Predicated region
  $region6: #{graphsage_forward.6} parent=0 // pred_check
    _
  $region7: #{graphsage_forward.6} parent=0 // pred_check_branch
    %13 = sbr.rel (0) target = $region9
  $region8: #{graphsage_forward.6} parent=0 // pred_region
    _
  $region9: #{graphsage_forward.6} parent=0 // pred_fallthru
    _
  // Predicated region
  $region10: #{graphsage_forward.6} parent=0 // pred_check
    _
  $region11: #{graphsage_forward.6} parent=0 // pred_check_branch
    %15 = sbr.rel (0) target = $region13
  $region12: #{graphsage_forward.6} parent=0 // pred_region
    _
  $region13: #{graphsage_forward.6} parent=0 // pred_fallthru
    _
  // Predicated region
  $region14: #{graphsage_forward.6} parent=0 // pred_check
    _
  $region15: #{graphsage_forward.6} parent=0 // pred_check_branch
    %17 = sbr.rel (0) target = $region17
  $region16: #{graphsage_forward.6} parent=0 // pred_region
    _
  $region17: #{graphsage_forward.6} parent=0 // pred_fallthru
    _
  // Predicated region
  $region18: #{graphsage_forward.6} parent=0 // pred_check
    _
  $region19: #{graphsage_forward.6} parent=0 // pred_check_branch
    %19 = sbr.rel (0) target = $region21
  $region20: #{graphsage_forward.6} parent=0 // pred_region
    _
  $region21: #{graphsage_forward.6} parent=0 // pred_fallthru
    _
  %p21 = scmp.eq.s32.totalorder 0, 0
  // Predicated region
  $region22: #{graphsage_forward.6} parent=0 // pred_check
    %p22 = pneg %p21
  $region23: #{graphsage_forward.6} parent=0 // pred_check_branch
    %24 = sbr.rel (%p22) target = $region25
  $region24: #{graphsage_forward.6} parent=0 // pred_region
    %25 = vst [vmem:[#allocation2] sm:$0xff] 0.0
    %26 = vst [vmem:[#allocation2 + $0x8] sm:$0xff] 0.0
  $region25: #{graphsage_forward.6} parent=0 // pred_fallthru
    _
  %v27 = vld [vmem:[#allocation2] sm:$0xff]
  %v28 = vld [vmem:[#allocation2 + $0x8] sm:$0xff]
  %v29 = vld [vmem:[%s0] sm:$0x3]
  %v30 = vld [vmem:[%s0 + $0x2] sm:$0x3]
  %v31 = vunpack.c.l.s8.bf16 %v29
  %v32 = vunpack.c.l.s8.bf16 %v30
  %v33 = vld [vmem:[%s1] sm:$0xf]
  %v34 = vld [vmem:[%s1 + $0x4] sm:$0xf]
  %v37 = vunpack.c.l.b16 %v31
  %v38 = vunpack.c.l.b16 %v32
  %v39 = vpack.c.b16 %v38, %v37
  %v42 = vunpack.c.l.b16 %v33
  %v43 = vunpack.c.l.b16 %v34
  %v44 = vpack.c.b16 %v43, %v42
  %vm46 = vcmask 130048
  %v48 = vsel %vm46, %v39, 0
  %50 = vmatprep.subr.bf16.mxu0 0
  %51 = vmatpush1.bf16.msra.mxu0 %v44
  %52 = vmatprep.subr.bf16.mxu0 0
  %53 = vmatpush1.bf16.msra.mxu0 0
  %54 = vmatprep.subr.bf16.mxu0 0
  %55 = vmatpush1.bf16.msra.mxu0 0
  %56 = vmatprep.subr.bf16.mxu0 0
  %57 = vmatpush1.bf16.msra.mxu0 0
  %58 = vmatprep.subr.bf16.mxu0 0
  %59 = vmatpush1.bf16.msra.mxu0 0
  %60 = vmatprep.subr.bf16.mxu0 0
  %61 = vmatpush1.bf16.msra.mxu0 0
  %62 = vmatprep.subr.bf16.mxu0 0
  %63 = vmatpush1.bf16.msra.mxu0 0
  %64 = vmatprep.subr.bf16.mxu0 0
  %65 = vmatpush1.bf16.msra.mxu0 0
  %66 = vmatprep.subr.bf16.mxu0 0
  %67 = vmatpush1.bf16.msra.mxu0 0
  %68 = vmatprep.subr.bf16.mxu0 0
  %69 = vmatpush1.bf16.msra.mxu0 0
  %70 = vmatprep.subr.bf16.mxu0 0
  %71 = vmatpush1.bf16.msra.mxu0 0
  %72 = vmatprep.subr.bf16.mxu0 0
  %73 = vmatpush1.bf16.msra.mxu0 0
  %74 = vmatprep.subr.bf16.mxu0 0
  %75 = vmatpush1.bf16.msra.mxu0 0
  %76 = vmatprep.subr.bf16.mxu0 0
  %77 = vmatpush1.bf16.msra.mxu0 0
  %78 = vmatprep.subr.bf16.mxu0 0
  %79 = vmatpush1.bf16.msra.mxu0 0
  %80 = vmatprep.subr.bf16.mxu0 0
  %81 = vmatpush1.bf16.msra.mxu0 0
  %82 = vmatprep.mubr.bf16.mxu0 0
  %83 = vmatmul.mubr.bf16.gmra.mrb[0].mxu0 %v48
  %v84 = vpop.f32.mrb[0].mxu0
  %v85 = vadd.f32 0.0, %v84
  %v86 = vpop.f32.mrb[0].mxu0
  %v87 = vpop.f32.mrb[0].mxu0
  %v88 = vadd.f32 0.0, %v87
  %v89 = vpop.f32.mrb[0].mxu0
  %90 = vdwg.mxu0
  %v91 = vadd.f32 %v27, %v85
  %v92 = vadd.f32 %v28, %v88
  %93 = vst [vmem:[#allocation2] sm:$0xff] %v91
  %94 = vst [vmem:[#allocation2 + $0x8] sm:$0xff] %v92
  // Predicated region
  $region26: #{graphsage_forward.6} parent=0 // pred_check
    %p95 = pneg %p21
  $region27: #{graphsage_forward.6} parent=0 // pred_check_branch
    %97 = sbr.rel (%p95) target = $region29
  $region28: #{graphsage_forward.6} parent=0 // pred_region
    %v98 = vld [vmem:[%s2] sm:$0xff]
    %v99 = vld [vmem:[%s2 + $0x8] sm:$0xff]
    %v100 = vld [vmem:[#allocation2] sm:$0xff]
    %v101 = vld [vmem:[#allocation2 + $0x8] sm:$0xff]
    %103 = vset.pattern.permute.xlu0 0
    %104 = vperm.xlu0 %103, %v98
    %v105 = vpop.permute.xlu0 %104
    %108 = vset.pattern.permute.xlu0 0
    %109 = vperm.xlu0 %108, %v99
    %v110 = vpop.permute.xlu0 %109
    %v112 = vmul.f32 %v105, %v100
    %v113 = vmul.f32 %v110, %v101
    %v114 = vld [vmem:[%s3] sm:$0x1]
    %v116 = vlaneseq
    %v117 = vshrl.u32 %v116, 7
    %v118 = vsub.s32 0, %v117
    %v119 = vrot.slane %v114, %v118
    %v121 = vadd.f32 %v112, %v119
    %v122 = vadd.f32 %v113, %v119
    %v123 = vld [vmem:[%s4] sm:$0xff]
    %v124 = vld [vmem:[%s4 + $0x8] sm:$0xff]
    %v125 = vmul.f32 %v121, %v123
    %v126 = vmul.f32 %v122, %v124
    %v127 = vxor.u32 %v125, 2147483648
    %v128 = vxor.u32 %v126, 2147483648
    %v129 = vmul.f32 %v127, 1.442695
    %v130 = vpow.pop %v129
    %v131 = vmul.f32 %v128, 1.442695
    %v132 = vpow.pop %v131
    %v133 = vadd.f32 %v130, 1.0
    %v134 = vadd.f32 %v132, 1.0
    %v135 = vrcp.pop %v133
    %v136 = vmul.f32 1.0, %v135
    %v137 = vrcp.pop %v134
    %v138 = vmul.f32 1.0, %v137
    %v139 = vpack.c.bf16 %v138, %v136
    %v141 = vunpack.c.l.b16 %v139
    %v142 = vunpack.c.h.b16 %v139
    %v143 = vpack.c.b16 %v141, %v141
    %v144 = vpack.c.b16 %v142, %v142
    %147 = vst [vmem:[%s5] sm:$0xf] %v143
    %148 = vst [vmem:[%s5 + $0x4] sm:$0xf] %v144
  $region29: #{graphsage_forward.6} parent=0 // pred_fallthru
    _
  // Predicated region
  $region30: #{graphsage_forward.6} parent=0 // pred_check
    _
  $region31: #{graphsage_forward.6} parent=0 // pred_check_branch
    %150 = sbr.rel (0) target = $region33
  $region32: #{graphsage_forward.6} parent=0 // pred_region
    _
  $region33: #{graphsage_forward.6} parent=0 // pred_fallthru
    _
  // Predicated region
  $region34: #{graphsage_forward.6} parent=0 // pred_check
    _
  $region35: #{graphsage_forward.6} parent=0 // pred_check_branch
    %152 = sbr.rel (0) target = $region37
  $region36: #{graphsage_forward.6} parent=0 // pred_region
    _
  $region37: #{graphsage_forward.6} parent=0 // pred_fallthru
    _

// kernel: graphsage_forward.8
$region0: #{graphsage_forward.8}
  #allocation0 [shape = 'u32[]', space=smem, size = 0x4, offset = 0x4, fixed_abs, tag = 'smem constant byte address 0x4 - core index']
  #allocation1 [shape = 'u32[144,128]{1,0:T(1,128)}', space=vmem, size = 0x12000, scoped, tag = 'internal scratch']
  #allocation2 [shape = 'f32[16,128]{1,0:T(8,128)}', space=vmem, size = 0x2000, scoped, tag = 'scratch operand']
  %s0 = inlined_call_operand.vmem [shape: s8[16,16], index: 0, kind: input, shape index: {}]
  %s1 = inlined_call_operand.vmem [shape: bf16[16,128], index: 1, kind: input, shape index: {}]
  %s2 = inlined_call_operand.vmem [shape: f32[16,1], index: 2, kind: input, shape index: {}]
  %s3 = inlined_call_operand.vmem [shape: f32[1,128], index: 3, kind: input, shape index: {}]
  %s4 = inlined_call_operand.vmem [shape: f32[16,128], index: 4, kind: output, shape index: {}]
  %s5 = sld [smem:[#allocation0]]
  $region34: #{graphsage_forward.8} parent=0
    _
  %s7 = ssub.s32 1, %s5
  %s8 = scalar_select 0, %s7, %s5
  // Predicated region
  $region2: #{graphsage_forward.8} parent=0 // pred_check
    _
  $region3: #{graphsage_forward.8} parent=0 // pred_check_branch
    %10 = sbr.rel (0) target = $region5
  $region4: #{graphsage_forward.8} parent=0 // pred_region
    _
  $region5: #{graphsage_forward.8} parent=0 // pred_fallthru
    _
  // Predicated region
  $region6: #{graphsage_forward.8} parent=0 // pred_check
    _
  $region7: #{graphsage_forward.8} parent=0 // pred_check_branch
    %12 = sbr.rel (0) target = $region9
  $region8: #{graphsage_forward.8} parent=0 // pred_region
    _
  $region9: #{graphsage_forward.8} parent=0 // pred_fallthru
    _
  // Predicated region
  $region10: #{graphsage_forward.8} parent=0 // pred_check
    _
  $region11: #{graphsage_forward.8} parent=0 // pred_check_branch
    %14 = sbr.rel (0) target = $region13
  $region12: #{graphsage_forward.8} parent=0 // pred_region
    _
  $region13: #{graphsage_forward.8} parent=0 // pred_fallthru
    _
  // Predicated region
  $region14: #{graphsage_forward.8} parent=0 // pred_check
    _
  $region15: #{graphsage_forward.8} parent=0 // pred_check_branch
    %16 = sbr.rel (0) target = $region17
  $region16: #{graphsage_forward.8} parent=0 // pred_region
    _
  $region17: #{graphsage_forward.8} parent=0 // pred_fallthru
    _
  %p18 = scmp.eq.s32.totalorder 0, 0
  // Predicated region
  $region18: #{graphsage_forward.8} parent=0 // pred_check
    %p19 = pneg %p18
  $region19: #{graphsage_forward.8} parent=0 // pred_check_branch
    %21 = sbr.rel (%p19) target = $region21
  $region20: #{graphsage_forward.8} parent=0 // pred_region
    %22 = vst [vmem:[#allocation2] sm:$0xff] 0.0
    %23 = vst [vmem:[#allocation2 + $0x8] sm:$0xff] 0.0
  $region21: #{graphsage_forward.8} parent=0 // pred_fallthru
    _
  %v24 = vld [vmem:[#allocation2] sm:$0xff]
  %v25 = vld [vmem:[#allocation2 + $0x8] sm:$0xff]
  %v26 = vld [vmem:[%s0] sm:$0x3]
  %v27 = vld [vmem:[%s0 + $0x2] sm:$0x3]
  %v28 = vunpack.c.l.s8.bf16 %v26
  %v29 = vunpack.c.l.s8.bf16 %v27
  %v30 = vld [vmem:[%s1] sm:$0xf]
  %v31 = vld [vmem:[%s1 + $0x4] sm:$0xf]
  %v34 = vunpack.c.l.b16 %v28
  %v35 = vunpack.c.l.b16 %v29
  %v36 = vpack.c.b16 %v35, %v34
  %v39 = vunpack.c.l.b16 %v30
  %v40 = vunpack.c.l.b16 %v31
  %v41 = vpack.c.b16 %v40, %v39
  %vm43 = vcmask 130048
  %v45 = vsel %vm43, %v36, 0
  %47 = vmatprep.subr.bf16.mxu0 0
  %48 = vmatpush1.bf16.msra.mxu0 %v41
  %49 = vmatprep.subr.bf16.mxu0 0
  %50 = vmatpush1.bf16.msra.mxu0 0
  %51 = vmatprep.subr.bf16.mxu0 0
  %52 = vmatpush1.bf16.msra.mxu0 0
  %53 = vmatprep.subr.bf16.mxu0 0
  %54 = vmatpush1.bf16.msra.mxu0 0
  %55 = vmatprep.subr.bf16.mxu0 0
  %56 = vmatpush1.bf16.msra.mxu0 0
  %57 = vmatprep.subr.bf16.mxu0 0
  %58 = vmatpush1.bf16.msra.mxu0 0
  %59 = vmatprep.subr.bf16.mxu0 0
  %60 = vmatpush1.bf16.msra.mxu0 0
  %61 = vmatprep.subr.bf16.mxu0 0
  %62 = vmatpush1.bf16.msra.mxu0 0
  %63 = vmatprep.subr.bf16.mxu0 0
  %64 = vmatpush1.bf16.msra.mxu0 0
  %65 = vmatprep.subr.bf16.mxu0 0
  %66 = vmatpush1.bf16.msra.mxu0 0
  %67 = vmatprep.subr.bf16.mxu0 0
  %68 = vmatpush1.bf16.msra.mxu0 0
  %69 = vmatprep.subr.bf16.mxu0 0
  %70 = vmatpush1.bf16.msra.mxu0 0
  %71 = vmatprep.subr.bf16.mxu0 0
  %72 = vmatpush1.bf16.msra.mxu0 0
  %73 = vmatprep.subr.bf16.mxu0 0
  %74 = vmatpush1.bf16.msra.mxu0 0
  %75 = vmatprep.subr.bf16.mxu0 0
  %76 = vmatpush1.bf16.msra.mxu0 0
  %77 = vmatprep.subr.bf16.mxu0 0
  %78 = vmatpush1.bf16.msra.mxu0 0
  %79 = vmatprep.mubr.bf16.mxu0 0
  %80 = vmatmul.mubr.bf16.gmra.mrb[0].mxu0 %v45
  %v81 = vpop.f32.mrb[0].mxu0
  %v82 = vadd.f32 0.0, %v81
  %v83 = vpop.f32.mrb[0].mxu0
  %v84 = vpop.f32.mrb[0].mxu0
  %v85 = vadd.f32 0.0, %v84
  %v86 = vpop.f32.mrb[0].mxu0
  %87 = vdwg.mxu0
  %v88 = vadd.f32 %v24, %v82
  %v89 = vadd.f32 %v25, %v85
  %90 = vst [vmem:[#allocation2] sm:$0xff] %v88
  %91 = vst [vmem:[#allocation2 + $0x8] sm:$0xff] %v89
  // Predicated region
  $region22: #{graphsage_forward.8} parent=0 // pred_check
    %p92 = pneg %p18
  $region23: #{graphsage_forward.8} parent=0 // pred_check_branch
    %94 = sbr.rel (%p92) target = $region25
  $region24: #{graphsage_forward.8} parent=0 // pred_region
    %v95 = vld [vmem:[%s2] sm:$0xff]
    %v96 = vld [vmem:[%s2 + $0x8] sm:$0xff]
    %v97 = vld [vmem:[#allocation2] sm:$0xff]
    %v98 = vld [vmem:[#allocation2 + $0x8] sm:$0xff]
    %100 = vset.pattern.permute.xlu0 0
    %101 = vperm.xlu0 %100, %v95
    %v102 = vpop.permute.xlu0 %101
    %105 = vset.pattern.permute.xlu0 0
    %106 = vperm.xlu0 %105, %v96
    %v107 = vpop.permute.xlu0 %106
    %v109 = vmul.f32 %v102, %v97
    %v110 = vmul.f32 %v107, %v98
    %v111 = vld [vmem:[%s3] sm:$0x1]
    %v113 = vlaneseq
    %v114 = vshrl.u32 %v113, 7
    %v115 = vsub.s32 0, %v114
    %v116 = vrot.slane %v111, %v115
    %v118 = vadd.f32 %v109, %v116
    %v119 = vadd.f32 %v110, %v116
    %120 = vst [vmem:[%s4] sm:$0xff] %v118
    %121 = vst [vmem:[%s4 + $0x8] sm:$0xff] %v119
  $region25: #{graphsage_forward.8} parent=0 // pred_fallthru
    _
  // Predicated region
  $region26: #{graphsage_forward.8} parent=0 // pred_check
    _
  $region27: #{graphsage_forward.8} parent=0 // pred_check_branch
    %123 = sbr.rel (0) target = $region29
  $region28: #{graphsage_forward.8} parent=0 // pred_region
    _
  $region29: #{graphsage_forward.8} parent=0 // pred_fallthru
    _
  // Predicated region
  $region30: #{graphsage_forward.8} parent=0 // pred_check
    _
  $region31: #{graphsage_forward.8} parent=0 // pred_check_branch
    %125 = sbr.rel (0) target = $region33
  $region32: #{graphsage_forward.8} parent=0 // pred_region
    _
  $region33: #{graphsage_forward.8} parent=0 // pred_fallthru
    _

// kernel: graphsage_forward.7
$region0: #{graphsage_forward.7}
  #allocation0 [shape = 'u32[]', space=smem, size = 0x4, offset = 0x4, fixed_abs, tag = 'smem constant byte address 0x4 - core index']
  #allocation1 [shape = 'u32[144,128]{1,0:T(1,128)}', space=vmem, size = 0x12000, scoped, tag = 'internal scratch']
  %s0 = inlined_call_operand.vmem [shape: bf16[16,128], index: 0, kind: input, shape index: {}]
  %s1 = inlined_call_operand.vmem [shape: f32[128,128], index: 1, kind: input, shape index: {}]
  %s2 = inlined_call_operand.vmem [shape: f32[16,1], index: 2, kind: input, shape index: {}]
  %s3 = inlined_call_operand.vmem [shape: bf16[16,128], index: 3, kind: output, shape index: {}]
  %s4 = sld [smem:[#allocation0]]
  $region22: #{graphsage_forward.7} parent=0
    _
  %s6 = ssub.s32 1, %s4
  %s7 = scalar_select 0, %s6, %s4
  // Predicated region
  $region2: #{graphsage_forward.7} parent=0 // pred_check
    _
  $region3: #{graphsage_forward.7} parent=0 // pred_check_branch
    %9 = sbr.rel (0) target = $region5
  $region4: #{graphsage_forward.7} parent=0 // pred_region
    _
  $region5: #{graphsage_forward.7} parent=0 // pred_fallthru
    _
  // Predicated region
  $region6: #{graphsage_forward.7} parent=0 // pred_check
    _
  $region7: #{graphsage_forward.7} parent=0 // pred_check_branch
    %11 = sbr.rel (0) target = $region9
  $region8: #{graphsage_forward.7} parent=0 // pred_region
    _
  $region9: #{graphsage_forward.7} parent=0 // pred_fallthru
    _
  // Predicated region
  $region10: #{graphsage_forward.7} parent=0 // pred_check
    _
  $region11: #{graphsage_forward.7} parent=0 // pred_check_branch
    %13 = sbr.rel (0) target = $region13
  $region12: #{graphsage_forward.7} parent=0 // pred_region
    _
  $region13: #{graphsage_forward.7} parent=0 // pred_fallthru
    _
  %v15 = vld [vmem:[%s0] sm:$0xf]
  %v16 = vld [vmem:[%s0 + $0x4] sm:$0xf]
  %v17 = vld [vmem:[%s1] sm:$0xff]
  %v18 = vld [vmem:[%s1 + $0x8] sm:$0xff]
  %v19 = vld [vmem:[%s1 + $0x10] sm:$0xff]
  %v20 = vld [vmem:[%s1 + $0x18] sm:$0xff]
  %v21 = vld [vmem:[%s1 + $0x20] sm:$0xff]
  %v22 = vld [vmem:[%s1 + $0x28] sm:$0xff]
  %v23 = vld [vmem:[%s1 + $0x30] sm:$0xff]
  %v24 = vld [vmem:[%s1 + $0x38] sm:$0xff]
  %v25 = vld [vmem:[%s1 + $0x40] sm:$0xff]
  %v26 = vld [vmem:[%s1 + $0x48] sm:$0xff]
  %v27 = vld [vmem:[%s1 + $0x50] sm:$0xff]
  %v28 = vld [vmem:[%s1 + $0x58] sm:$0xff]
  %v29 = vld [vmem:[%s1 + $0x60] sm:$0xff]
  %v30 = vld [vmem:[%s1 + $0x68] sm:$0xff]
  %v31 = vld [vmem:[%s1 + $0x70] sm:$0xff]
  %v32 = vld [vmem:[%s1 + $0x78] sm:$0xff]
  %v33 = vpack.c.bf16 %v18, %v17
  %v34 = vpack.c.bf16 %v20, %v19
  %v35 = vpack.c.bf16 %v22, %v21
  %v36 = vpack.c.bf16 %v24, %v23
  %v37 = vpack.c.bf16 %v26, %v25
  %v38 = vpack.c.bf16 %v28, %v27
  %v39 = vpack.c.bf16 %v30, %v29
  %v40 = vpack.c.bf16 %v32, %v31
  %v43 = vunpack.c.l.b16 %v15
  %v44 = vunpack.c.l.b16 %v16
  %v45 = vpack.c.b16 %v44, %v43
  %47 = vmatprep.subr.bf16.mxu0 0
  %48 = vmatpush1.bf16.msra.mxu0 %v33
  %49 = vmatprep.subr.bf16.mxu0 0
  %50 = vmatpush1.bf16.msra.mxu0 %v34
  %51 = vmatprep.subr.bf16.mxu0 0
  %52 = vmatpush1.bf16.msra.mxu0 %v35
  %53 = vmatprep.subr.bf16.mxu0 0
  %54 = vmatpush1.bf16.msra.mxu0 %v36
  %55 = vmatprep.subr.bf16.mxu0 0
  %56 = vmatpush1.bf16.msra.mxu0 %v37
  %57 = vmatprep.subr.bf16.mxu0 0
  %58 = vmatpush1.bf16.msra.mxu0 %v38
  %59 = vmatprep.subr.bf16.mxu0 0
  %60 = vmatpush1.bf16.msra.mxu0 %v39
  %61 = vmatprep.subr.bf16.mxu0 0
  %62 = vmatpush1.bf16.msra.mxu0 %v40
  %63 = vmatprep.subr.bf16.mxu0 0
  %64 = vmatpush1.bf16.msra.mxu0 0
  %65 = vmatprep.subr.bf16.mxu0 0
  %66 = vmatpush1.bf16.msra.mxu0 0
  %67 = vmatprep.subr.bf16.mxu0 0
  %68 = vmatpush1.bf16.msra.mxu0 0
  %69 = vmatprep.subr.bf16.mxu0 0
  %70 = vmatpush1.bf16.msra.mxu0 0
  %71 = vmatprep.subr.bf16.mxu0 0
  %72 = vmatpush1.bf16.msra.mxu0 0
  %73 = vmatprep.subr.bf16.mxu0 0
  %74 = vmatpush1.bf16.msra.mxu0 0
  %75 = vmatprep.subr.bf16.mxu0 0
  %76 = vmatpush1.bf16.msra.mxu0 0
  %77 = vmatprep.subr.bf16.mxu0 0
  %78 = vmatpush1.bf16.msra.mxu0 0
  %79 = vmatprep.mubr.bf16.mxu0 0
  %80 = vmatmul.mubr.bf16.gmra.mrb[0].mxu0 %v45
  %v81 = vpop.f32.mrb[0].mxu0
  %v82 = vadd.f32 0.0, %v81
  %v83 = vpop.f32.mrb[0].mxu0
  %v84 = vpop.f32.mrb[0].mxu0
  %v85 = vadd.f32 0.0, %v84
  %v86 = vpop.f32.mrb[0].mxu0
  %87 = vdwg.mxu0
  %v88 = vld [vmem:[%s2] sm:$0xff]
  %v89 = vld [vmem:[%s2 + $0x8] sm:$0xff]
  %91 = vset.pattern.permute.xlu0 0
  %92 = vperm.xlu0 %91, %v88
  %v93 = vpop.permute.xlu0 %92
  %96 = vset.pattern.permute.xlu0 0
  %97 = vperm.xlu0 %96, %v89
  %v98 = vpop.permute.xlu0 %97
  %v100 = vmul.f32 %v93, %v82
  %v101 = vmul.f32 %v98, %v85
  %v102 = vpack.c.bf16 %v101, %v100
  %v104 = vunpack.c.l.b16 %v102
  %v105 = vunpack.c.h.b16 %v102
  %v106 = vpack.c.b16 %v104, %v104
  %v107 = vpack.c.b16 %v105, %v105
  %110 = vst [vmem:[%s3] sm:$0xf] %v106
  %111 = vst [vmem:[%s3 + $0x4] sm:$0xf] %v107
  // Predicated region
  $region14: #{graphsage_forward.7} parent=0 // pred_check
    _
  $region15: #{graphsage_forward.7} parent=0 // pred_check_branch
    %113 = sbr.rel (0) target = $region17
  $region16: #{graphsage_forward.7} parent=0 // pred_region
    _
  $region17: #{graphsage_forward.7} parent=0 // pred_fallthru
    _
  // Predicated region
  $region18: #{graphsage_forward.7} parent=0 // pred_check
    _
  $region19: #{graphsage_forward.7} parent=0 // pred_check_branch
    %115 = sbr.rel (0) target = $region21
  $region20: #{graphsage_forward.7} parent=0 // pred_region
    _
  $region21: #{graphsage_forward.7} parent=0 // pred_fallthru
    _

// kernel: graphsage_forward.9
$region0: #{graphsage_forward.9}
  #allocation0 [shape = 'u32[]', space=smem, size = 0x4, offset = 0x4, fixed_abs, tag = 'smem constant byte address 0x4 - core index']
  #allocation1 [shape = 'u32[144,128]{1,0:T(1,128)}', space=vmem, size = 0x12000, scoped, tag = 'internal scratch']
  %s0 = inlined_call_operand.vmem [shape: f32[4,64], index: 0, kind: input, shape index: {}]
  %s1 = inlined_call_operand.vmem [shape: f32[64,256], index: 1, kind: input, shape index: {}]
  %s2 = inlined_call_operand.vmem [shape: f32[1,256], index: 2, kind: input, shape index: {}]
  %s3 = inlined_call_operand.vmem [shape: f32[1,256], index: 3, kind: input, shape index: {}]
  %s4 = inlined_call_operand.vmem [shape: f32[1,256], index: 4, kind: input, shape index: {}]
  %s5 = inlined_call_operand.vmem [shape: f32[256,128], index: 5, kind: input, shape index: {}]
  %s6 = inlined_call_operand.vmem [shape: f32[1,128], index: 6, kind: input, shape index: {}]
  %s7 = inlined_call_operand.vmem [shape: f32[16,128], index: 7, kind: input, shape index: {}]
  %s8 = inlined_call_operand.vmem [shape: s32[4,4], index: 8, kind: input, shape index: {}]
  %s9 = inlined_call_operand.hbm [shape: f32[4,4], index: 9, kind: output, shape index: {}]
  %s10 = sld [smem:[#allocation0]]
  $region46: #{graphsage_forward.9} parent=0
    _
  %s12 = ssub.s32 1, %s10
  %s13 = scalar_select 0, %s12, %s10
  $region1: #{graphsage_forward.9} parent=0
    #allocation2 [shape = 'u8[2048]{0}', space=vmem, size = 0x800, scoped, tag = 'output window, operand 0, single buffered']
    #allocation3 [shape = 's32[1]{0}', space=sflag, size = 0x4, scoped, tag = 'scoped memory for graphsage_forward.9']
    %14 = vsyncpa [#allocation3], 0
    // Predicated region
    $region2: #{graphsage_forward.9} parent=1 // pred_check
      _
    $region3: #{graphsage_forward.9} parent=1 // pred_check_branch
      %16 = sbr.rel (0) target = $region5
    $region4: #{graphsage_forward.9} parent=1 // pred_region
      _
    $region5: #{graphsage_forward.9} parent=1 // pred_fallthru
      _
    // Predicated region
    $region6: #{graphsage_forward.9} parent=1 // pred_check
      _
    $region7: #{graphsage_forward.9} parent=1 // pred_check_branch
      %18 = sbr.rel (0) target = $region9
    $region8: #{graphsage_forward.9} parent=1 // pred_region
      _
    $region9: #{graphsage_forward.9} parent=1 // pred_fallthru
      _
    // Predicated region
    $region10: #{graphsage_forward.9} parent=1 // pred_check
      _
    $region11: #{graphsage_forward.9} parent=1 // pred_check_branch
      %20 = sbr.rel (0) target = $region13
    $region12: #{graphsage_forward.9} parent=1 // pred_region
      _
    $region13: #{graphsage_forward.9} parent=1 // pred_fallthru
      _
    // Predicated region
    $region14: #{graphsage_forward.9} parent=1 // pred_check
      _
    $region15: #{graphsage_forward.9} parent=1 // pred_check_branch
      %22 = sbr.rel (0) target = $region17
    $region16: #{graphsage_forward.9} parent=1 // pred_region
      _
    $region17: #{graphsage_forward.9} parent=1 // pred_fallthru
      _
    // Predicated region
    $region18: #{graphsage_forward.9} parent=1 // pred_check
      _
    $region19: #{graphsage_forward.9} parent=1 // pred_check_branch
      %24 = sbr.rel (0) target = $region21
    $region20: #{graphsage_forward.9} parent=1 // pred_region
      _
    $region21: #{graphsage_forward.9} parent=1 // pred_fallthru
      _
    // Predicated region
    $region22: #{graphsage_forward.9} parent=1 // pred_check
      _
    $region23: #{graphsage_forward.9} parent=1 // pred_check_branch
      %26 = sbr.rel (0) target = $region25
    $region24: #{graphsage_forward.9} parent=1 // pred_region
      _
    $region25: #{graphsage_forward.9} parent=1 // pred_fallthru
      _
    // Predicated region
    $region26: #{graphsage_forward.9} parent=1 // pred_check
      _
    $region27: #{graphsage_forward.9} parent=1 // pred_check_branch
      %28 = sbr.rel (0) target = $region29
    $region28: #{graphsage_forward.9} parent=1 // pred_region
      _
    $region29: #{graphsage_forward.9} parent=1 // pred_fallthru
      _
    // Predicated region
    $region30: #{graphsage_forward.9} parent=1 // pred_check
      _
    $region31: #{graphsage_forward.9} parent=1 // pred_check_branch
      %30 = sbr.rel (0) target = $region33
    $region32: #{graphsage_forward.9} parent=1 // pred_region
      _
    $region33: #{graphsage_forward.9} parent=1 // pred_fallthru
      _
    // Predicated region
    $region34: #{graphsage_forward.9} parent=1 // pred_check
      _
    $region35: #{graphsage_forward.9} parent=1 // pred_check_branch
      %32 = sbr.rel (0) target = $region37
    $region36: #{graphsage_forward.9} parent=1 // pred_region
      _
    $region37: #{graphsage_forward.9} parent=1 // pred_fallthru
      _
    %v34 = vld [vmem:[%s0] sm:$0xf]
    %v35 = vpack.c.bf16 %v34, %v34
    %v36 = vld [vmem:[%s1] sm:$0xff]
    %v37 = vld [vmem:[%s1 + $0x8] sm:$0xff]
    %v38 = vld [vmem:[%s1 + $0x10] sm:$0xff]
    %v39 = vld [vmem:[%s1 + $0x18] sm:$0xff]
    %v40 = vld [vmem:[%s1 + $0x20] sm:$0xff]
    %v41 = vld [vmem:[%s1 + $0x28] sm:$0xff]
    %v42 = vld [vmem:[%s1 + $0x30] sm:$0xff]
    %v43 = vld [vmem:[%s1 + $0x38] sm:$0xff]
    %v44 = vld [vmem:[%s1 + $0x40] sm:$0xff]
    %v45 = vld [vmem:[%s1 + $0x48] sm:$0xff]
    %v46 = vld [vmem:[%s1 + $0x50] sm:$0xff]
    %v47 = vld [vmem:[%s1 + $0x58] sm:$0xff]
    %v48 = vld [vmem:[%s1 + $0x60] sm:$0xff]
    %v49 = vld [vmem:[%s1 + $0x68] sm:$0xff]
    %v50 = vld [vmem:[%s1 + $0x70] sm:$0xff]
    %v51 = vld [vmem:[%s1 + $0x78] sm:$0xff]
    %v52 = vpack.c.bf16 %v38, %v36
    %v53 = vpack.c.bf16 %v39, %v37
    %v54 = vpack.c.bf16 %v42, %v40
    %v55 = vpack.c.bf16 %v43, %v41
    %v56 = vpack.c.bf16 %v46, %v44
    %v57 = vpack.c.bf16 %v47, %v45
    %v58 = vpack.c.bf16 %v50, %v48
    %v59 = vpack.c.bf16 %v51, %v49
    %v60 = vld [vmem:[%s2] sm:$0x3]
    %v62 = vlaneseq
    %v63 = vshrl.u32 %v62, 7
    %v64 = vsub.s32 0, %v63
    %v65 = vrot.slane %v60, %v64
    %v66 = vlaneseq
    %v67 = vshrl.u32 %v66, 7
    %v68 = vsub.s32 1, %v67
    %v69 = vrot.slane %v60, %v68
    %vm72 = vcmask 523264
    %v74 = vsel %vm72, %v35, 0
    %76 = vmatprep.subr.bf16.mxu0 %v53
    %77 = vmatpush1.bf16.msra.mxu0 %v52
    %78 = vmatprep.subr.bf16.mxu0 %v55
    %79 = vmatpush1.bf16.msra.mxu0 %v54
    %80 = vmatprep.subr.bf16.mxu0 %v57
    %81 = vmatpush1.bf16.msra.mxu0 %v56
    %82 = vmatprep.subr.bf16.mxu0 %v59
    %83 = vmatpush1.bf16.msra.mxu0 %v58
    %84 = vmatprep.subr.bf16.mxu0 0
    %85 = vmatpush1.bf16.msra.mxu0 0
    %86 = vmatprep.subr.bf16.mxu0 0
    %87 = vmatpush1.bf16.msra.mxu0 0
    %88 = vmatprep.subr.bf16.mxu0 0
    %89 = vmatpush1.bf16.msra.mxu0 0
    %90 = vmatprep.subr.bf16.mxu0 0
    %91 = vmatpush1.bf16.msra.mxu0 0
    %92 = vmatprep.subr.bf16.mxu0 0
    %93 = vmatpush1.bf16.msra.mxu0 0
    %94 = vmatprep.subr.bf16.mxu0 0
    %95 = vmatpush1.bf16.msra.mxu0 0
    %96 = vmatprep.subr.bf16.mxu0 0
    %97 = vmatpush1.bf16.msra.mxu0 0
    %98 = vmatprep.subr.bf16.mxu0 0
    %99 = vmatpush1.bf16.msra.mxu0 0
    %100 = vmatprep.subr.bf16.mxu0 0
    %101 = vmatpush1.bf16.msra.mxu0 0
    %102 = vmatprep.subr.bf16.mxu0 0
    %103 = vmatpush1.bf16.msra.mxu0 0
    %104 = vmatprep.subr.bf16.mxu0 0
    %105 = vmatpush1.bf16.msra.mxu0 0
    %106 = vmatprep.subr.bf16.mxu0 0
    %107 = vmatpush1.bf16.msra.mxu0 0
    %108 = vmatprep.mubr.bf16.mxu0 0
    %109 = vmatmul.mubr.bf16.gmra.mrb[0].mxu0 %v74
    %v110 = vpop.f32.mrb[0].mxu0
    %v111 = vadd.f32 %v65, %v110
    %v112 = vpop.f32.mrb[0].mxu0
    %v113 = vadd.f32 %v69, %v112
    %v114 = vpop.f32.mrb[0].mxu0
    %v115 = vpop.f32.mrb[0].mxu0
    %116 = vdwg.mxu0
    %vm117 = vcmask 1043456
    %v118 = vsel %vm117, %v111, 0.0
    %v119 = vrot.slane %v118, 4
    %v120 = vadd.f32 %v118, %v119
    %v121 = vrot.slane %v120, 2
    %v122 = vadd.f32 %v120, %v121
    %v123 = vrot.slane %v122, 1
    %v124 = vadd.f32 %v122, %v123
    %v125 = vsel %vm117, %v113, 0.0
    %v126 = vrot.slane %v125, 4
    %v127 = vadd.f32 %v125, %v126
    %v128 = vrot.slane %v127, 2
    %v129 = vadd.f32 %v127, %v128
    %v130 = vrot.slane %v129, 1
    %v131 = vadd.f32 %v129, %v130
    %v132 = vrcp.pop 4.0
    %v133 = vmul.f32 %v124, %v132
    %v134 = vmul.f32 %v131, %v132
    %v135 = vsub.f32 %v111, %v133
    %v136 = vsub.f32 %v113, %v134
    %v137 = vmul.f32 %v135, %v135
    %v138 = vmul.f32 %v136, %v136
    %v139 = vsel %vm117, %v137, 0.0
    %v140 = vrot.slane %v139, 4
    %v141 = vadd.f32 %v139, %v140
    %v142 = vrot.slane %v141, 2
    %v143 = vadd.f32 %v141, %v142
    %v144 = vrot.slane %v143, 1
    %v145 = vadd.f32 %v143, %v144
    %v146 = vsel %vm117, %v138, 0.0
    %v147 = vrot.slane %v146, 4
    %v148 = vadd.f32 %v146, %v147
    %v149 = vrot.slane %v148, 2
    %v150 = vadd.f32 %v148, %v149
    %v151 = vrot.slane %v150, 1
    %v152 = vadd.f32 %v150, %v151
    %v153 = vmul.f32 %v145, %v132
    %v154 = vmul.f32 %v152, %v132
    %v155 = vadd.f32 %v153, 1e-05
    %v156 = vadd.f32 %v154, 1e-05
    %v157 = vrsqrt.pop %v155
    %v158 = vrsqrt.pop %v156
    %v159 = vmul.f32 %v135, %v157
    %v160 = vmul.f32 %v136, %v158
    %v161 = vld [vmem:[%s3] sm:$0x3]
    %v163 = vlaneseq
    %v164 = vshrl.u32 %v163, 7
    %v165 = vsub.s32 0, %v164
    %v166 = vrot.slane %v161, %v165
    %v167 = vlaneseq
    %v168 = vshrl.u32 %v167, 7
    %v169 = vsub.s32 1, %v168
    %v170 = vrot.slane %v161, %v169
    %v173 = vmul.f32 %v159, %v166
    %v174 = vmul.f32 %v160, %v170
    %v175 = vld [vmem:[%s4] sm:$0x3]
    %v177 = vlaneseq
    %v178 = vshrl.u32 %v177, 7
    %v179 = vsub.s32 0, %v178
    %v180 = vrot.slane %v175, %v179
    %v181 = vlaneseq
    %v182 = vshrl.u32 %v181, 7
    %v183 = vsub.s32 1, %v182
    %v184 = vrot.slane %v175, %v183
    %v187 = vadd.f32 %v173, %v180
    %v188 = vadd.f32 %v174, %v184
    %v189 = vxor.u32 %v187, 2147483648
    %v190 = vxor.u32 %v188, 2147483648
    %v191 = vmul.f32 %v189, 1.442695
    %v192 = vpow.pop %v191
    %v193 = vmul.f32 %v190, 1.442695
    %v194 = vpow.pop %v193
    %v195 = vadd.f32 %v192, 1.0
    %v196 = vadd.f32 %v194, 1.0
    %v197 = vrcp.pop %v195
    %v198 = vmul.f32 1.0, %v197
    %v199 = vrcp.pop %v196
    %v200 = vmul.f32 1.0, %v199
    %v201 = vpack.c.bf16 %v198, %v198
    %v202 = vpack.c.bf16 %v200, %v200
    %v203 = vld [vmem:[%s5] sm:$0xff]
    %v204 = vld [vmem:[%s5 + $0x8] sm:$0xff]
    %v205 = vld [vmem:[%s5 + $0x10] sm:$0xff]
    %v206 = vld [vmem:[%s5 + $0x18] sm:$0xff]
    %v207 = vld [vmem:[%s5 + $0x20] sm:$0xff]
    %v208 = vld [vmem:[%s5 + $0x28] sm:$0xff]
    %v209 = vld [vmem:[%s5 + $0x30] sm:$0xff]
    %v210 = vld [vmem:[%s5 + $0x38] sm:$0xff]
    %v211 = vld [vmem:[%s5 + $0x40] sm:$0xff]
    %v212 = vld [vmem:[%s5 + $0x48] sm:$0xff]
    %v213 = vld [vmem:[%s5 + $0x50] sm:$0xff]
    %v214 = vld [vmem:[%s5 + $0x58] sm:$0xff]
    %v215 = vld [vmem:[%s5 + $0x60] sm:$0xff]
    %v216 = vld [vmem:[%s5 + $0x68] sm:$0xff]
    %v217 = vld [vmem:[%s5 + $0x70] sm:$0xff]
    %v218 = vld [vmem:[%s5 + $0x78] sm:$0xff]
    %v219 = vld [vmem:[%s5 + $0x80] sm:$0xff]
    %v220 = vld [vmem:[%s5 + $0x88] sm:$0xff]
    %v221 = vld [vmem:[%s5 + $0x90] sm:$0xff]
    %v222 = vld [vmem:[%s5 + $0x98] sm:$0xff]
    %v223 = vld [vmem:[%s5 + $0xa0] sm:$0xff]
    %v224 = vld [vmem:[%s5 + $0xa8] sm:$0xff]
    %v225 = vld [vmem:[%s5 + $0xb0] sm:$0xff]
    %v226 = vld [vmem:[%s5 + $0xb8] sm:$0xff]
    %v227 = vld [vmem:[%s5 + $0xc0] sm:$0xff]
    %v228 = vld [vmem:[%s5 + $0xc8] sm:$0xff]
    %v229 = vld [vmem:[%s5 + $0xd0] sm:$0xff]
    %v230 = vld [vmem:[%s5 + $0xd8] sm:$0xff]
    %v231 = vld [vmem:[%s5 + $0xe0] sm:$0xff]
    %v232 = vld [vmem:[%s5 + $0xe8] sm:$0xff]
    %v233 = vld [vmem:[%s5 + $0xf0] sm:$0xff]
    %v234 = vld [vmem:[%s5 + $0xf8] sm:$0xff]
    %v235 = vpack.c.bf16 %v204, %v203
    %v236 = vpack.c.bf16 %v206, %v205
    %v237 = vpack.c.bf16 %v208, %v207
    %v238 = vpack.c.bf16 %v210, %v209
    %v239 = vpack.c.bf16 %v212, %v211
    %v240 = vpack.c.bf16 %v214, %v213
    %v241 = vpack.c.bf16 %v216, %v215
    %v242 = vpack.c.bf16 %v218, %v217
    %v243 = vpack.c.bf16 %v220, %v219
    %v244 = vpack.c.bf16 %v222, %v221
    %v245 = vpack.c.bf16 %v224, %v223
    %v246 = vpack.c.bf16 %v226, %v225
    %v247 = vpack.c.bf16 %v228, %v227
    %v248 = vpack.c.bf16 %v230, %v229
    %v249 = vpack.c.bf16 %v232, %v231
    %v250 = vpack.c.bf16 %v234, %v233
    %v251 = vld [vmem:[%s6] sm:$0x1]
    %v253 = vlaneseq
    %v254 = vshrl.u32 %v253, 7
    %v255 = vsub.s32 0, %v254
    %v256 = vrot.slane %v251, %v255
    %258 = vmatprep.subr.bf16.mxu0 0
    %259 = vmatpush1.bf16.msra.mxu0 %v235
    %260 = vmatprep.subr.bf16.mxu0 0
    %261 = vmatpush1.bf16.msra.mxu0 %v236
    %262 = vmatprep.subr.bf16.mxu0 0
    %263 = vmatpush1.bf16.msra.mxu0 %v237
    %264 = vmatprep.subr.bf16.mxu0 0
    %265 = vmatpush1.bf16.msra.mxu0 %v238
    %266 = vmatprep.subr.bf16.mxu0 0
    %267 = vmatpush1.bf16.msra.mxu0 %v239
    %268 = vmatprep.subr.bf16.mxu0 0
    %269 = vmatpush1.bf16.msra.mxu0 %v240
    %270 = vmatprep.subr.bf16.mxu0 0
    %271 = vmatpush1.bf16.msra.mxu0 %v241
    %272 = vmatprep.subr.bf16.mxu0 0
    %273 = vmatpush1.bf16.msra.mxu0 %v242
    %274 = vmatprep.subr.bf16.mxu0 0
    %275 = vmatpush1.bf16.msra.mxu0 %v243
    %276 = vmatprep.subr.bf16.mxu0 0
    %277 = vmatpush1.bf16.msra.mxu0 %v244
    %278 = vmatprep.subr.bf16.mxu0 0
    %279 = vmatpush1.bf16.msra.mxu0 %v245
    %280 = vmatprep.subr.bf16.mxu0 0
    %281 = vmatpush1.bf16.msra.mxu0 %v246
    %282 = vmatprep.subr.bf16.mxu0 0
    %283 = vmatpush1.bf16.msra.mxu0 %v247
    %284 = vmatprep.subr.bf16.mxu0 0
    %285 = vmatpush1.bf16.msra.mxu0 %v248
    %286 = vmatprep.subr.bf16.mxu0 0
    %287 = vmatpush1.bf16.msra.mxu0 %v249
    %288 = vmatprep.subr.bf16.mxu0 0
    %289 = vmatpush1.bf16.msra.mxu0 %v250
    %290 = vmatprep.mubr.bf16.mxu0 %v202
    %291 = vmatmul.mubr.bf16.gmra.mrb[0].mxu0 %v201
    %v292 = vpop.f32.mrb[0].mxu0
    %v293 = vadd.f32 %v256, %v292
    %v294 = vpop.f32.mrb[0].mxu0
    %v295 = vpop.f32.mrb[0].mxu0
    %v296 = vpop.f32.mrb[0].mxu0
    %297 = vdwg.mxu0
    %v298 = vld [vmem:[%s7] sm:$0xff]
    %v299 = vld [vmem:[%s7 + $0x8] sm:$0xff]
    %300 = vmatprep.subr.mxu0 0.0
    %301 = vmatpush1.xpose.msra.mxu0 %v298
    %302 = vmatprep.subr.mxu0 0.0
    %303 = vmatpush1.xpose.msra.mxu0 %v299
    %304 = vmatprep.subr.mxu0 0.0
    %305 = vmatpush1.xpose.msra.mxu0 0.0
    %306 = vmatprep.subr.mxu0 0.0
    %307 = vmatpush1.xpose.msra.mxu0 0.0
    %308 = vmatprep.subr.mxu0 0.0
    %309 = vmatpush1.xpose.msra.mxu0 0.0
    %310 = vmatprep.subr.mxu0 0.0
    %311 = vmatpush1.xpose.msra.mxu0 0.0
    %312 = vmatprep.subr.mxu0 0.0
    %313 = vmatpush1.xpose.msra.mxu0 0.0
    %314 = vmatprep.subr.mxu0 0.0
    %315 = vmatpush1.xpose.msra.mxu0 0.0
    %316 = vmatprep.subr.mxu0 0.0
    %317 = vmatpush1.xpose.msra.mxu0 0.0
    %318 = vmatprep.subr.mxu0 0.0
    %319 = vmatpush1.xpose.msra.mxu0 0.0
    %320 = vmatprep.subr.mxu0 0.0
    %321 = vmatpush1.xpose.msra.mxu0 0.0
    %322 = vmatprep.subr.mxu0 0.0
    %323 = vmatpush1.xpose.msra.mxu0 0.0
    %324 = vmatprep.subr.mxu0 0.0
    %325 = vmatpush1.xpose.msra.mxu0 0.0
    %326 = vmatprep.subr.mxu0 0.0
    %327 = vmatpush1.xpose.msra.mxu0 0.0
    %328 = vmatprep.subr.mxu0 0.0
    %329 = vmatpush1.xpose.msra.mxu0 0.0
    %330 = vmatprep.subr.mxu0 0.0
    %331 = vmatpush1.xpose.msra.mxu0 0.0
    %332 = vmatprep.subr.mxu0 0.0
    %333 = vmatpush1.xpose.msra.mxu0 0.0
    %334 = vmatprep.subr.mxu0 0.0
    %335 = vmatpush1.xpose.msra.mxu0 0.0
    %336 = vmatprep.subr.mxu0 0.0
    %337 = vmatpush1.xpose.msra.mxu0 0.0
    %338 = vmatprep.subr.mxu0 0.0
    %339 = vmatpush1.xpose.msra.mxu0 0.0
    %340 = vmatprep.subr.mxu0 0.0
    %341 = vmatpush1.xpose.msra.mxu0 0.0
    %342 = vmatprep.subr.mxu0 0.0
    %343 = vmatpush1.xpose.msra.mxu0 0.0
    %344 = vmatprep.subr.mxu0 0.0
    %345 = vmatpush1.xpose.msra.mxu0 0.0
    %346 = vmatprep.subr.mxu0 0.0
    %347 = vmatpush1.xpose.msra.mxu0 0.0
    %348 = vmatprep.subr.mxu0 0.0
    %349 = vmatpush1.xpose.msra.mxu0 0.0
    %350 = vmatprep.subr.mxu0 0.0
    %351 = vmatpush1.xpose.msra.mxu0 0.0
    %352 = vmatprep.subr.mxu0 0.0
    %353 = vmatpush1.xpose.msra.mxu0 0.0
    %354 = vmatprep.subr.mxu0 0.0
    %355 = vmatpush1.xpose.msra.mxu0 0.0
    %356 = vmatprep.subr.mxu0 0.0
    %357 = vmatpush1.xpose.msra.mxu0 0.0
    %358 = vmatprep.subr.mxu0 0.0
    %359 = vmatpush1.xpose.msra.mxu0 0.0
    %360 = vmatprep.subr.mxu0 0.0
    %361 = vmatpush1.xpose.msra.mxu0 0.0
    %362 = vmatprep.subr.mxu0 0.0
    %363 = vmatpush1.xpose.msra.mxu0 0.0
    %364 = vmatprep.mubr.f32.mxu0 0.0
    %365 = vmatmul.mubr.f32.gmra.mrb[0].mxu0 %v293
    %v366 = vpop.f32.mrb[0].mxu0
    %v367 = vadd.f32 0.0, %v366
    %v368 = vpop.f32.mrb[0].mxu0
    %369 = vdwg.mxu0
    %v370 = vld [vmem:[%s8] sm:$0xf]
    %v371 = vlaneseq
    %v372 = vand.u32 %v371, 127
    %v373 = vlaneseq
    %v374 = vshrl.u32 %v373, 7
    %v375 = vsub.s32 0, %v374
    %v376 = vrot.slane %v370, %v375
    %378 = vbcast.lane.b32.xlu0 %v376, 256
    %v379 = vpop.permute.xlu0 %378
    %v380 = vlaneseq
    %v381 = vshrl.u32 %v380, 7
    %v382 = vsub.s32 1, %v381
    %v383 = vrot.slane %v370, %v382
    %385 = vbcast.lane.b32.xlu0 %v383, 256
    %v386 = vpop.permute.xlu0 %385
    %v387 = vlaneseq
    %v388 = vshrl.u32 %v387, 7
    %v389 = vsub.s32 2, %v388
    %v390 = vrot.slane %v370, %v389
    %392 = vbcast.lane.b32.xlu0 %v390, 256
    %v393 = vpop.permute.xlu0 %392
    %v394 = vlaneseq
    %v395 = vshrl.u32 %v394, 7
    %v396 = vsub.s32 3, %v395
    %v397 = vrot.slane %v370, %v396
    %399 = vbcast.lane.b32.xlu0 %v397, 256
    %v400 = vpop.permute.xlu0 %399
    %vm401 = vcmp.eq.s32.totalorder %v372, %v379
    %vm402 = vcmp.eq.s32.totalorder %v372, %v386
    %vm403 = vcmp.eq.s32.totalorder %v372, %v393
    %vm404 = vcmp.eq.s32.totalorder %v372, %v400
    %v407 = vunpack.c.l.s4 1966171168
    %v408 = vunpack.c.0.s8 %v407
    %v409 = vlaneseq
    %v410 = vshrl.u32 %v409, 7
    %v411 = vsub.s32 %v408, %v410
    %v412 = vrot.slane %v367, %v411
    %v413 = vcombine.high %v412, %v412
    %v415 = vunpack.c.l.s4 1966171168
    %v416 = vunpack.c.0.s8 %v415
    %v417 = vlaneseq
    %v418 = vshrl.u32 %v417, 7
    %v419 = vsub.s32 %v416, %v418
    %v420 = vrot.slane %v412, %v419
    %v422 = vunpack.c.l.s4 1966171168
    %v423 = vunpack.c.0.s8 %v422
    %v424 = vlaneseq
    %v425 = vshrl.u32 %v424, 7
    %v426 = vsub.s32 %v423, %v425
    %v427 = vrot.slane %v413, %v426
    %v428 = vcombine.high %v420, %v420
    %v429 = vcombine.high %v427, %v427
    %v430 = vlaneseq
    %v431 = vshrl.u32 %v430, 7
    %v432 = vsub.s32 0, %v431
    %v433 = vrot.slane %v420, %v432
    %v434 = vlaneseq
    %v435 = vshrl.u32 %v434, 7
    %v436 = vsub.s32 0, %v435
    %v437 = vrot.slane %v427, %v436
    %v438 = vlaneseq
    %v439 = vshrl.u32 %v438, 7
    %v440 = vsub.s32 0, %v439
    %v441 = vrot.slane %v428, %v440
    %v442 = vlaneseq
    %v443 = vshrl.u32 %v442, 7
    %v444 = vsub.s32 0, %v443
    %v445 = vrot.slane %v429, %v444
    %v450 = vsel %vm401, %v433, 0.0
    %v451 = vsel %vm402, %v437, 0.0
    %v452 = vsel %vm403, %v441, 0.0
    %v453 = vsel %vm404, %v445, 0.0
    %vm454 = vcmask 125952
    %v455 = vsel %vm454, %v450, 0.0
    %456 = vadd.xlane.f32.xlu0 %v455
    %v457 = vpop.xlane.xlu0 %456
    %v458 = vsel %vm454, %v451, 0.0
    %459 = vadd.xlane.f32.xlu0 %v458
    %v460 = vpop.xlane.xlu0 %459
    %v461 = vsel %vm454, %v452, 0.0
    %462 = vadd.xlane.f32.xlu0 %v461
    %v463 = vpop.xlane.xlu0 %462
    %v464 = vsel %vm454, %v453, 0.0
    %465 = vadd.xlane.f32.xlu0 %v464
    %v466 = vpop.xlane.xlu0 %465
    %v471 = vlaneseq
    %v472 = vshrl.u32 %v471, 7
    %v473 = vsub.s32 %v372, %v472
    %v474 = vrot.slane %v457, %v473
    %v475 = vlaneseq
    %v476 = vshrl.u32 %v475, 7
    %v477 = vsub.s32 %v372, %v476
    %v478 = vrot.slane %v460, %v477
    %v479 = vlaneseq
    %v480 = vshrl.u32 %v479, 7
    %v481 = vsub.s32 %v372, %v480
    %v482 = vrot.slane %v463, %v481
    %v483 = vlaneseq
    %v484 = vshrl.u32 %v483, 7
    %v485 = vsub.s32 %v372, %v484
    %v486 = vrot.slane %v466, %v485
    %vm487 = vcmask 1041409
    %v488 = vsel %vm487, %v478, %v474
    %vm489 = vcmask 1042434
    %v490 = vsel %vm489, %v482, %v488
    %vm491 = vcmask 1043459
    %v492 = vsel %vm491, %v486, %v490
    %vm494 = vcmask 27648
    %495 = vst.msk [vmem:[#allocation2] sm:$0xf] %vm494, %v492
    // Predicated region
    $region38: #{graphsage_forward.9} parent=1 // pred_check
      _
    $region39: #{graphsage_forward.9} parent=1 // pred_check_branch
      %497 = sbr.rel (0) target = $region41
    $region40: #{graphsage_forward.9} parent=1 // pred_region
      %s499 = ssub.s32 64, 64
      %500 = vsyncadd [#allocation3], %s499
      %s502 = sshll.u32 [#allocation2], 4
      %s503 = int_to_ptr.vmem [resolvable:$true] %s502
      %505 = dma.vmem_to_hbm [thread:$0]  %s503, 64, %s9, [#allocation3]
    $region41: #{graphsage_forward.9} parent=1 // pred_fallthru
      _
    // Predicated region
    $region42: #{graphsage_forward.9} parent=1 // pred_check
      _
    $region43: #{graphsage_forward.9} parent=1 // pred_check_branch
      %507 = sbr.rel (0) target = $region45
    $region44: #{graphsage_forward.9} parent=1 // pred_region
      %508 = dma.done [#allocation3], 64
    $region45: #{graphsage_forward.9} parent=1 // pred_fallthru
      _
    %509 = vsyncpa [#allocation3], 1

</llo_original>
